<compile_context>
chip_gen: v6e
topology: v6e:2x2x1
jax: 0.10.0
libtpu: 0.0.40
codegen_flags: <defaults>
</compile_context>

<pallas_src>
import functools

import jax
import jax.numpy as jnp
from jax import lax
from jax.experimental import pallas as pl
from jax.experimental.pallas import tpu as pltpu

NEG_FILL = float(-2 ** 32 + 1)


def _layer_norm(z, gamma, beta, eps=1e-5):
    mu = jnp.mean(z, axis=-1, keepdims=True)
    var = jnp.mean((z - mu) ** 2, axis=-1, keepdims=True)
    return (z - mu) * lax.rsqrt(var + eps) * gamma + beta


def tcan_kernel(x_ref, causal_ref, pad_ref, a_ref,
                wx_ref, w2_ref, b12_ref, wq_ref, wo_ref,
                l1w_ref, l1b_ref, l2w_ref, l2b_ref, g_ref, be_ref,
                out_ref, ctx_ref, *, B, S, D, n_heads, d_k, d_v, w1_cols):
    x = x_ref[...]                                   # (B*S, D) f32, batch folded into rows
    xb = x.astype(jnp.bfloat16)

    # ---- stageDivision: cs = A_blockdiag @ x (A is exact 0/1 in bf16) --------------------
    cs = jnp.dot(a_ref[...], xb, preferred_element_type=jnp.float32)          # (B*S, D) f32

    # ---- one pass of x through the MXU: [W1(padded) | W_k | W_v] fused -------------------
    xproj = jnp.dot(xb, wx_ref[...], preferred_element_type=jnp.float32)      # (B*S, w1_cols+H*(dk+dv))
    k_off = w1_cols
    v_off = w1_cols + n_heads * d_k

    # ---- Fusion gate: a = sigmoid(W1(x) + W2(cs)); q = (1-a)*x + a*cs --------------------
    gate_pre = (xproj[:, :D]
                + jnp.dot(cs.astype(jnp.bfloat16), w2_ref[...],
                          preferred_element_type=jnp.float32)
                + b12_ref[...])
    a = pl.reciprocal(1.0 + jnp.exp(-gate_pre), approx=True)   # sigmoid via EUP reciprocal
    q = x + a * (cs - x)

    # ---- Q projection (W_q pre-scaled by 1/(sqrt(d_k)+1e-6) host-side) -------------------
    Qp = jnp.dot(q.astype(jnp.bfloat16), wq_ref[...],
                 preferred_element_type=jnp.float32)                           # (B*S, H*d_k)

    causal = causal_ref[...] > 0.5                                             # (S, S)
    padf = pad_ref[...]                                                        # (B*S, 1)

    # ---- attention per (batch, head); contexts land in one (B*S, H*d_v) scratch ----------
    for b in range(B):
        r0 = b * S
        mask_b = jnp.logical_or(causal, padf[r0:r0 + S, :] > 0.5)              # (S, S)
        for h in range(n_heads):
            Qh = Qp[r0:r0 + S, h * d_k:(h + 1) * d_k].astype(jnp.bfloat16)
            Kh = xproj[r0:r0 + S, k_off + h * d_k:k_off + (h + 1) * d_k].astype(jnp.bfloat16)
            Vh = xproj[r0:r0 + S, v_off + h * d_v:v_off + (h + 1) * d_v].astype(jnp.bfloat16)
            scores = lax.dot_general(Qh, Kh, (((1,), (1,)), ((), ())),
                                     preferred_element_type=jnp.float32)       # (S, S) f32
            scores = jnp.where(mask_b, NEG_FILL, scores)
            m = jnp.max(scores, axis=-1, keepdims=True)
            e = jnp.exp(scores - m)
            attn = e * pl.reciprocal(jnp.sum(e, axis=-1, keepdims=True), approx=True)
            ctx = jnp.dot(attn.astype(jnp.bfloat16), Vh,
                          preferred_element_type=jnp.float32)                  # (S, d_v)
            ctx_ref[pl.ds(r0, S), pl.ds(h * d_v, d_v)] = ctx

    # ---- single fused output projection over all heads and batch rows --------------------
    att_out = jnp.dot(ctx_ref[...].astype(jnp.bfloat16), wo_ref[...],
                      preferred_element_type=jnp.float32)                      # (B*S, D)

    # ---- residual + LayerNorm + FFN + LayerNorm (shared LN params) -----------------------
    gamma = g_ref[...]
    beta = be_ref[...]
    X = _layer_norm(q + att_out, gamma, beta)
    hmid = jnp.maximum(
        jnp.dot(X.astype(jnp.bfloat16), l1w_ref[...],
                preferred_element_type=jnp.float32) + l1b_ref[...], 0.0)
    ffn = jnp.dot(hmid.astype(jnp.bfloat16), l2w_ref[...],
                  preferred_element_type=jnp.float32) + l2b_ref[...]
    out_ref[...] = _layer_norm(ffn + X, gamma, beta).astype(out_ref.dtype)


def tcan_forward(inputs, pad_mask, params, *, n_heads, d_k, d_v, ws):
    B, S, D = inputs.shape
    BS = B * S
    bf16 = jnp.bfloat16

    # --- host-side structural precompute ---------------------------------------------------
    t_idx = jnp.arange(S)[:, None]
    s_idx = jnp.arange(S)[None, :]
    pre_rows = s_idx < t_idx                                   # t < ws : sum_{s <  t}
    win_rows = (s_idx <= t_idx) & (s_idx > t_idx - ws)         # t >= ws: sum_{t-ws < s <= t}
    A = jnp.where(t_idx < ws, pre_rows, win_rows).astype(jnp.float32)         # (S, S)
    A_bd = jnp.zeros((BS, BS), jnp.float32)                    # block-diag over folded batch
    for b in range(B):
        A_bd = A_bd.at[b * S:(b + 1) * S, b * S:(b + 1) * S].set(A)
    A_bd = A_bd.astype(bf16)                                   # exact 0/1 values in bf16

    causal = (s_idx > t_idx).astype(jnp.float32)               # shared (S, S) causal mask
    padcol = pad_mask.reshape(BS, 1).astype(jnp.float32)       # query-row pad mask (B*S, 1)

    # --- host-side weight fusion / pre-scaling (bf16 matmul operands) ----------------------
    w1_cols = ((D + 127) // 128) * 128
    w1_pad = jnp.zeros((D, w1_cols), jnp.float32).at[:, :D].set(params["W1"])
    wx = jnp.concatenate([w1_pad, params["W_k"], params["W_v"]], axis=1).astype(bf16)
    w2 = params["W2"].astype(bf16)
    b12 = params["b1"] + params["b2"]
    wq = (params["W_q"] * (1.0 / (d_k ** 0.5 + 1e-6))).astype(bf16)
    wo = params["W_o"].astype(bf16)
    l1w = params["l1w"].astype(bf16)
    l2w = params["l2w"].astype(bf16)

    x2 = inputs.reshape(BS, D)

    args = [x2, causal, padcol, A_bd, wx, w2, b12, wq, wo,
            l1w, params["l1b"], l2w, params["l2b"], params["ln_g"], params["ln_b"]]

    def fs(arr):
        n = arr.ndim
        return pl.BlockSpec(arr.shape, lambda i, n=n: (0,) * n)

    kernel = functools.partial(tcan_kernel, B=B, S=S, D=D,
                               n_heads=n_heads, d_k=d_k, d_v=d_v, w1_cols=w1_cols)

    out = pl.pallas_call(
        kernel,
        out_shape=jax.ShapeDtypeStruct((BS, D), jnp.float32),
        grid=(1,),
        in_specs=[fs(a) for a in args],
        out_specs=pl.BlockSpec((BS, D), lambda i: (0, 0)),
        scratch_shapes=[pltpu.VMEM((BS, n_heads * d_v), jnp.float32)],
        compiler_params=pltpu.CompilerParams(dimension_semantics=("arbitrary",)),
    )(*args)
    return out.reshape(B, S, D)          # final TCAN dropout = identity (eval)


def tcan_reference(inputs, pad_mask, params, *, n_heads, d_k, d_v, ws):
    """Plain-JAX f32 reference mirroring the PyTorch TCAN forward (eval mode)."""
    B, S, D = inputs.shape
    cumsum = jnp.cumsum(inputs, axis=1)
    i_clone = inputs.at[:, ws:, :].set(cumsum[:, :-ws, :])
    current_stage = cumsum - i_clone
    a = jax.nn.sigmoid(inputs @ params["W1"] + params["b1"]
                       + current_stage @ params["W2"] + params["b2"])
    query = (1 - a) * inputs + a * current_stage

    x = inputs
    temp = d_k ** 0.5 + 1e-6
    Q = (query @ params["W_q"]).reshape(B, S, n_heads, d_k).transpose(0, 2, 1, 3)
    K = (x @ params["W_k"]).reshape(B, S, n_heads, d_k).transpose(0, 2, 1, 3)
    V = (x @ params["W_v"]).reshape(B, S, n_heads, d_v).transpose(0, 2, 1, 3)
    scores = jnp.einsum("bhqd,bhkd->bhqk", Q, K) / temp
    causal = jnp.triu(jnp.ones((S, S), bool), k=1)
    mask_ = causal[None] | pad_mask[:, :, None]
    scores = jnp.where(mask_[:, None], NEG_FILL, scores)
    attn = jax.nn.softmax(scores, axis=-1)
    v_att = jnp.einsum("bhqk,bhkd->bhqd", attn, V)
    v_att = v_att.transpose(0, 2, 1, 3).reshape(B, S, n_heads * d_v)
    att_out = v_att @ params["W_o"]

    def ln(z):
        mu = z.mean(-1, keepdims=True)
        var = ((z - mu) ** 2).mean(-1, keepdims=True)
        return (z - mu) / jnp.sqrt(var + 1e-5) * params["ln_g"] + params["ln_b"]

    X = ln(query + att_out)
    ffn = jax.nn.relu(X @ params["l1w"] + params["l1b"]) @ params["l2w"] + params["l2b"]
    return ln(ffn + X)


def init_params(key, *, dim, n_heads, d_k, d_v):
    ks = jax.random.split(key, 10)

    def xavier(k, shape):
        std = (2.0 / (shape[0] + shape[1])) ** 0.5
        return jax.random.normal(k, shape, jnp.float32) * std

    return {
        # Fusion
        "W1": xavier(ks[0], (dim, dim)),
        "b1": jax.random.normal(ks[1], (1, dim), jnp.float32) * 0.01,
        "W2": xavier(ks[2], (dim, dim)),
        "b2": jax.random.normal(ks[3], (1, dim), jnp.float32) * 0.01,
        # TrmEncoder
        "W_q": xavier(ks[4], (dim, n_heads * d_k)),
        "W_k": xavier(ks[5], (dim, n_heads * d_k)),
        "W_v": xavier(ks[6], (dim, n_heads * d_v)),
        "W_o": xavier(ks[7], (n_heads * d_v, dim)),
        "l1w": xavier(ks[8], (dim, dim)),
        "l1b": jnp.zeros((1, dim), jnp.float32),
        "l2w": xavier(ks[9], (dim, dim)),
        "l2b": jnp.zeros((1, dim), jnp.float32),
        "ln_g": jnp.ones((1, dim), jnp.float32),
        "ln_b": jnp.zeros((1, dim), jnp.float32),
    }


if __name__ == "__main__":
    B, S, D = 2, 8, 32                 # batch, seq_len, dim
    n_heads, d_k, d_v = 4, 128, 128    # TrmEncoder defaults
    ws = 3                             # TCAN window_size

    key = jax.random.PRNGKey(0)
    k_in, k_par = jax.random.split(key, 2)

    inputs = jax.random.normal(k_in, (B, S, D), jnp.float32)
    # padded positions: second example has last 2 positions padded (True = masked)
    pad_mask = jnp.array(
        [[False] * S,
         [False] * (S - 2) + [True] * 2], dtype=jnp.bool_)

    params = init_params(k_par, dim=D, n_heads=n_heads, d_k=d_k, d_v=d_v)

    out = tcan_forward(inputs, pad_mask, params,
                       n_heads=n_heads, d_k=d_k, d_v=d_v, ws=ws)
    out = jax.block_until_ready(out)

    ref = tcan_reference(inputs, pad_mask, params,
                         n_heads=n_heads, d_k=d_k, d_v=d_v, ws=ws)
    ref = jax.block_until_ready(ref)

    assert out.shape == (B, S, D)
    # tolerance covers bf16 matmul operands + EUP approx reciprocals vs. the f32 reference
    err = jnp.max(jnp.abs(out - ref))
    assert jnp.allclose(out, ref, atol=5e-2, rtol=5e-2), f"max abs err {err}"
    print("KERNEL_OK")
</pallas_src>

<mosaic_0001>
module attributes {stable_mosaic.version = 11 : i64} {
  func.func @tcan_kernel(%arg0: i32, %arg1: memref<16x32xf32, #tpu.memory_space<vmem>>, %arg2: memref<8x8xf32, #tpu.memory_space<vmem>>, %arg3: memref<16x1xf32, #tpu.memory_space<vmem>>, %arg4: memref<16x16xbf16, #tpu.memory_space<vmem>>, %arg5: memref<32x1152xbf16, #tpu.memory_space<vmem>>, %arg6: memref<32x32xbf16, #tpu.memory_space<vmem>>, %arg7: memref<1x32xf32, #tpu.memory_space<vmem>>, %arg8: memref<32x512xbf16, #tpu.memory_space<vmem>>, %arg9: memref<512x32xbf16, #tpu.memory_space<vmem>>, %arg10: memref<32x32xbf16, #tpu.memory_space<vmem>>, %arg11: memref<1x32xf32, #tpu.memory_space<vmem>>, %arg12: memref<32x32xbf16, #tpu.memory_space<vmem>>, %arg13: memref<1x32xf32, #tpu.memory_space<vmem>>, %arg14: memref<1x32xf32, #tpu.memory_space<vmem>>, %arg15: memref<1x32xf32, #tpu.memory_space<vmem>>, %arg16: memref<16x32xf32, #tpu.memory_space<vmem>>, %arg17: memref<16x512xf32, #tpu.memory_space<vmem>>) attributes {dimension_semantics = [#tpu.dimension_semantics<arbitrary>], iteration_bounds = array<i64: 1>, scalar_prefetch = 0 : i64, scratch_operands = 1 : i64, tpu.core_type = #tpu.core_type<tc>, window_params = [{pipeline_mode = #tpu.pipeline_mode<synchronous>, transform_indices = @transform_0, window_bounds = array<i64: 16, 32>}, {pipeline_mode = #tpu.pipeline_mode<synchronous>, transform_indices = @transform_1, window_bounds = array<i64: 8, 8>}, {pipeline_mode = #tpu.pipeline_mode<synchronous>, transform_indices = @transform_2, window_bounds = array<i64: 16, 1>}, {pipeline_mode = #tpu.pipeline_mode<synchronous>, transform_indices = @transform_3, window_bounds = array<i64: 16, 16>}, {pipeline_mode = #tpu.pipeline_mode<synchronous>, transform_indices = @transform_4, window_bounds = array<i64: 32, 1152>}, {pipeline_mode = #tpu.pipeline_mode<synchronous>, transform_indices = @transform_5, window_bounds = array<i64: 32, 32>}, {pipeline_mode = #tpu.pipeline_mode<synchronous>, transform_indices = @transform_6, window_bounds = array<i64: 1, 32>}, {pipeline_mode = #tpu.pipeline_mode<synchronous>, transform_indices = @transform_7, window_bounds = array<i64: 32, 512>}, {pipeline_mode = #tpu.pipeline_mode<synchronous>, transform_indices = @transform_8, window_bounds = array<i64: 512, 32>}, {pipeline_mode = #tpu.pipeline_mode<synchronous>, transform_indices = @transform_9, window_bounds = array<i64: 32, 32>}, {pipeline_mode = #tpu.pipeline_mode<synchronous>, transform_indices = @transform_10, window_bounds = array<i64: 1, 32>}, {pipeline_mode = #tpu.pipeline_mode<synchronous>, transform_indices = @transform_11, window_bounds = array<i64: 32, 32>}, {pipeline_mode = #tpu.pipeline_mode<synchronous>, transform_indices = @transform_12, window_bounds = array<i64: 1, 32>}, {pipeline_mode = #tpu.pipeline_mode<synchronous>, transform_indices = @transform_13, window_bounds = array<i64: 1, 32>}, {pipeline_mode = #tpu.pipeline_mode<synchronous>, transform_indices = @transform_14, window_bounds = array<i64: 1, 32>}, {pipeline_mode = #tpu.pipeline_mode<synchronous>, transform_indices = @transform_15, window_bounds = array<i64: 16, 32>}]} {
    %c0 = arith.constant 0 : index
    %c0_0 = arith.constant 0 : index
    %0 = vector.load %arg1[%c0, %c0_0] : memref<16x32xf32, #tpu.memory_space<vmem>>, vector<16x32xf32>
    %1 = arith.truncf %0 : vector<16x32xf32> to vector<16x32xbf16>
    %c0_1 = arith.constant 0 : index
    %c0_2 = arith.constant 0 : index
    %2 = vector.load %arg4[%c0_1, %c0_2] : memref<16x16xbf16, #tpu.memory_space<vmem>>, vector<16x16xbf16>
    %cst = arith.constant dense<0.000000e+00> : vector<16x32xf32>
    %3 = tpu.matmul %2, %1, %cst {dimension_numbers = #tpu.dot_dimension_numbers<[1], [0], [0], [1], [0, 0, 1, 1], [], []>} : vector<16x16xbf16>, vector<16x32xbf16>, vector<16x32xf32> -> vector<16x32xf32>
    %c0_3 = arith.constant 0 : index
    %c0_4 = arith.constant 0 : index
    %4 = vector.load %arg5[%c0_3, %c0_4] : memref<32x1152xbf16, #tpu.memory_space<vmem>>, vector<32x1152xbf16>
    %cst_5 = arith.constant dense<0.000000e+00> : vector<16x1152xf32>
    %5 = tpu.matmul %1, %4, %cst_5 {dimension_numbers = #tpu.dot_dimension_numbers<[1], [0], [0], [1], [0, 0, 1, 1], [], []>} : vector<16x32xbf16>, vector<32x1152xbf16>, vector<16x1152xf32> -> vector<16x1152xf32>
    %6 = vector.extract_strided_slice %5 {offsets = [0, 0], sizes = [16, 32], strides = [1, 1]} : vector<16x1152xf32> to vector<16x32xf32>
    %7 = arith.truncf %3 : vector<16x32xf32> to vector<16x32xbf16>
    %c0_6 = arith.constant 0 : index
    %c0_7 = arith.constant 0 : index
    %8 = vector.load %arg6[%c0_6, %c0_7] : memref<32x32xbf16, #tpu.memory_space<vmem>>, vector<32x32xbf16>
    %cst_8 = arith.constant dense<0.000000e+00> : vector<16x32xf32>
    %9 = tpu.matmul %7, %8, %cst_8 {dimension_numbers = #tpu.dot_dimension_numbers<[1], [0], [0], [1], [0, 0, 1, 1], [], []>} : vector<16x32xbf16>, vector<32x32xbf16>, vector<16x32xf32> -> vector<16x32xf32>
    %10 = arith.addf %6, %9 : vector<16x32xf32>
    %c0_9 = arith.constant 0 : index
    %c0_10 = arith.constant 0 : index
    %11 = vector.load %arg7[%c0_9, %c0_10] : memref<1x32xf32, #tpu.memory_space<vmem>>, vector<1x32xf32>
    %12 = vector.broadcast %11 : vector<1x32xf32> to vector<16x32xf32>
    %13 = arith.addf %10, %12 : vector<16x32xf32>
    %cst_11 = arith.constant 0.000000e+00 : f32
    %14 = vector.broadcast %cst_11 : f32 to vector<16x32xf32>
    %15 = arith.subf %14, %13 : vector<16x32xf32>
    %16 = math.exp %15 : vector<16x32xf32>
    %cst_12 = arith.constant 1.000000e+00 : f32
    %17 = vector.broadcast %cst_12 : f32 to vector<16x32xf32>
    %18 = arith.addf %17, %16 : vector<16x32xf32>
    %19 = tpu.reciprocal %18 {approx = true} : vector<16x32xf32> -> vector<16x32xf32>
    %20 = arith.subf %3, %0 : vector<16x32xf32>
    %21 = arith.mulf %19, %20 : vector<16x32xf32>
    %22 = arith.addf %0, %21 : vector<16x32xf32>
    %23 = arith.truncf %22 : vector<16x32xf32> to vector<16x32xbf16>
    %c0_13 = arith.constant 0 : index
    %c0_14 = arith.constant 0 : index
    %24 = vector.load %arg8[%c0_13, %c0_14] : memref<32x512xbf16, #tpu.memory_space<vmem>>, vector<32x512xbf16>
    %cst_15 = arith.constant dense<0.000000e+00> : vector<16x512xf32>
    %25 = tpu.matmul %23, %24, %cst_15 {dimension_numbers = #tpu.dot_dimension_numbers<[1], [0], [0], [1], [0, 0, 1, 1], [], []>} : vector<16x32xbf16>, vector<32x512xbf16>, vector<16x512xf32> -> vector<16x512xf32>
    %c0_16 = arith.constant 0 : index
    %c0_17 = arith.constant 0 : index
    %26 = vector.load %arg2[%c0_16, %c0_17] : memref<8x8xf32, #tpu.memory_space<vmem>>, vector<8x8xf32>
    %cst_18 = arith.constant 5.000000e-01 : f32
    %27 = vector.broadcast %cst_18 : f32 to vector<8x8xf32>
    %28 = arith.cmpf ogt, %26, %27 : vector<8x8xf32>
    %c0_19 = arith.constant 0 : index
    %c0_20 = arith.constant 0 : index
    %29 = vector.load %arg3[%c0_19, %c0_20] : memref<16x1xf32, #tpu.memory_space<vmem>>, vector<16x1xf32>
    %30 = vector.extract_strided_slice %29 {offsets = [0, 0], sizes = [8, 1], strides = [1, 1]} : vector<16x1xf32> to vector<8x1xf32>
    %cst_21 = arith.constant 5.000000e-01 : f32
    %31 = vector.broadcast %cst_21 : f32 to vector<8x1xf32>
    %32 = arith.cmpf ogt, %30, %31 : vector<8x1xf32>
    %33 = vector.broadcast %32 : vector<8x1xi1> to vector<8x8xi1>
    %34 = arith.ori %28, %33 : vector<8x8xi1>
    %35 = vector.extract_strided_slice %25 {offsets = [0, 0], sizes = [8, 128], strides = [1, 1]} : vector<16x512xf32> to vector<8x128xf32>
    %36 = arith.truncf %35 : vector<8x128xf32> to vector<8x128xbf16>
    %37 = vector.extract_strided_slice %5 {offsets = [0, 128], sizes = [8, 128], strides = [1, 1]} : vector<16x1152xf32> to vector<8x128xf32>
    %38 = arith.truncf %37 : vector<8x128xf32> to vector<8x128xbf16>
    %39 = vector.extract_strided_slice %5 {offsets = [0, 640], sizes = [8, 128], strides = [1, 1]} : vector<16x1152xf32> to vector<8x128xf32>
    %40 = arith.truncf %39 : vector<8x128xf32> to vector<8x128xbf16>
    %cst_22 = arith.constant dense<0.000000e+00> : vector<8x8xf32>
    %41 = tpu.matmul %36, %38, %cst_22 {dimension_numbers = #tpu.dot_dimension_numbers<[1], [1], [0], [0], [0, 0, 1, 0], [], []>} : vector<8x128xbf16>, vector<8x128xbf16>, vector<8x8xf32> -> vector<8x8xf32>
    %cst_23 = arith.constant -4.2949673E+9 : f32
    %42 = vector.broadcast %cst_23 : f32 to vector<8x8xf32>
    %43 = arith.select %34, %42, %41 : vector<8x8xi1>, vector<8x8xf32>
    %cst_24 = arith.constant dense<0xFF800000> : vector<8xf32>
    %44 = vector.multi_reduction <maximumf>, %43, %cst_24 [1] : vector<8x8xf32> to vector<8xf32>
    %45 = vector.shape_cast %44 : vector<8xf32> to vector<8x1xf32>
    %46 = vector.broadcast %45 : vector<8x1xf32> to vector<8x8xf32>
    %47 = arith.subf %43, %46 : vector<8x8xf32>
    %48 = math.exp %47 : vector<8x8xf32>
    %cst_25 = arith.constant dense<0.000000e+00> : vector<8xf32>
    %49 = vector.multi_reduction <add>, %48, %cst_25 [1] : vector<8x8xf32> to vector<8xf32>
    %50 = vector.shape_cast %49 : vector<8xf32> to vector<8x1xf32>
    %51 = tpu.reciprocal %50 {approx = true} : vector<8x1xf32> -> vector<8x1xf32>
    %52 = vector.broadcast %51 : vector<8x1xf32> to vector<8x8xf32>
    %53 = arith.mulf %48, %52 : vector<8x8xf32>
    %54 = arith.truncf %53 : vector<8x8xf32> to vector<8x8xbf16>
    %cst_26 = arith.constant dense<0.000000e+00> : vector<8x128xf32>
    %55 = tpu.matmul %54, %40, %cst_26 {dimension_numbers = #tpu.dot_dimension_numbers<[1], [0], [0], [1], [0, 0, 1, 1], [], []>} : vector<8x8xbf16>, vector<8x128xbf16>, vector<8x128xf32> -> vector<8x128xf32>
    %c0_27 = arith.constant 0 : index
    %c0_28 = arith.constant 0 : index
    %56 = vector.load %arg17[%c0_27, %c0_28] : memref<16x512xf32, #tpu.memory_space<vmem>>, vector<8x128xf32>
    tpu.vector_store %arg17[%c0_27, %c0_28], %55 {strides = array<i32>} : memref<16x512xf32, #tpu.memory_space<vmem>>, vector<8x128xf32>,
    %57 = vector.extract_strided_slice %25 {offsets = [0, 128], sizes = [8, 128], strides = [1, 1]} : vector<16x512xf32> to vector<8x128xf32>
    %58 = arith.truncf %57 : vector<8x128xf32> to vector<8x128xbf16>
    %59 = vector.extract_strided_slice %5 {offsets = [0, 256], sizes = [8, 128], strides = [1, 1]} : vector<16x1152xf32> to vector<8x128xf32>
    %60 = arith.truncf %59 : vector<8x128xf32> to vector<8x128xbf16>
    %61 = vector.extract_strided_slice %5 {offsets = [0, 768], sizes = [8, 128], strides = [1, 1]} : vector<16x1152xf32> to vector<8x128xf32>
    %62 = arith.truncf %61 : vector<8x128xf32> to vector<8x128xbf16>
    %cst_29 = arith.constant dense<0.000000e+00> : vector<8x8xf32>
    %63 = tpu.matmul %58, %60, %cst_29 {dimension_numbers = #tpu.dot_dimension_numbers<[1], [1], [0], [0], [0, 0, 1, 0], [], []>} : vector<8x128xbf16>, vector<8x128xbf16>, vector<8x8xf32> -> vector<8x8xf32>
    %cst_30 = arith.constant -4.2949673E+9 : f32
    %64 = vector.broadcast %cst_30 : f32 to vector<8x8xf32>
    %65 = arith.select %34, %64, %63 : vector<8x8xi1>, vector<8x8xf32>
    %cst_31 = arith.constant dense<0xFF800000> : vector<8xf32>
    %66 = vector.multi_reduction <maximumf>, %65, %cst_31 [1] : vector<8x8xf32> to vector<8xf32>
    %67 = vector.shape_cast %66 : vector<8xf32> to vector<8x1xf32>
    %68 = vector.broadcast %67 : vector<8x1xf32> to vector<8x8xf32>
    %69 = arith.subf %65, %68 : vector<8x8xf32>
    %70 = math.exp %69 : vector<8x8xf32>
    %cst_32 = arith.constant dense<0.000000e+00> : vector<8xf32>
    %71 = vector.multi_reduction <add>, %70, %cst_32 [1] : vector<8x8xf32> to vector<8xf32>
    %72 = vector.shape_cast %71 : vector<8xf32> to vector<8x1xf32>
    %73 = tpu.reciprocal %72 {approx = true} : vector<8x1xf32> -> vector<8x1xf32>
    %74 = vector.broadcast %73 : vector<8x1xf32> to vector<8x8xf32>
    %75 = arith.mulf %70, %74 : vector<8x8xf32>
    %76 = arith.truncf %75 : vector<8x8xf32> to vector<8x8xbf16>
    %cst_33 = arith.constant dense<0.000000e+00> : vector<8x128xf32>
    %77 = tpu.matmul %76, %62, %cst_33 {dimension_numbers = #tpu.dot_dimension_numbers<[1], [0], [0], [1], [0, 0, 1, 1], [], []>} : vector<8x8xbf16>, vector<8x128xbf16>, vector<8x128xf32> -> vector<8x128xf32>
    %c0_34 = arith.constant 0 : index
    %c128 = arith.constant 128 : index
    %78 = vector.load %arg17[%c0_34, %c128] : memref<16x512xf32, #tpu.memory_space<vmem>>, vector<8x128xf32>
    tpu.vector_store %arg17[%c0_34, %c128], %77 {strides = array<i32>} : memref<16x512xf32, #tpu.memory_space<vmem>>, vector<8x128xf32>,
    %79 = vector.extract_strided_slice %25 {offsets = [0, 256], sizes = [8, 128], strides = [1, 1]} : vector<16x512xf32> to vector<8x128xf32>
    %80 = arith.truncf %79 : vector<8x128xf32> to vector<8x128xbf16>
    %81 = vector.extract_strided_slice %5 {offsets = [0, 384], sizes = [8, 128], strides = [1, 1]} : vector<16x1152xf32> to vector<8x128xf32>
    %82 = arith.truncf %81 : vector<8x128xf32> to vector<8x128xbf16>
    %83 = vector.extract_strided_slice %5 {offsets = [0, 896], sizes = [8, 128], strides = [1, 1]} : vector<16x1152xf32> to vector<8x128xf32>
    %84 = arith.truncf %83 : vector<8x128xf32> to vector<8x128xbf16>
    %cst_35 = arith.constant dense<0.000000e+00> : vector<8x8xf32>
    %85 = tpu.matmul %80, %82, %cst_35 {dimension_numbers = #tpu.dot_dimension_numbers<[1], [1], [0], [0], [0, 0, 1, 0], [], []>} : vector<8x128xbf16>, vector<8x128xbf16>, vector<8x8xf32> -> vector<8x8xf32>
    %cst_36 = arith.constant -4.2949673E+9 : f32
    %86 = vector.broadcast %cst_36 : f32 to vector<8x8xf32>
    %87 = arith.select %34, %86, %85 : vector<8x8xi1>, vector<8x8xf32>
    %cst_37 = arith.constant dense<0xFF800000> : vector<8xf32>
    %88 = vector.multi_reduction <maximumf>, %87, %cst_37 [1] : vector<8x8xf32> to vector<8xf32>
    %89 = vector.shape_cast %88 : vector<8xf32> to vector<8x1xf32>
    %90 = vector.broadcast %89 : vector<8x1xf32> to vector<8x8xf32>
    %91 = arith.subf %87, %90 : vector<8x8xf32>
    %92 = math.exp %91 : vector<8x8xf32>
    %cst_38 = arith.constant dense<0.000000e+00> : vector<8xf32>
    %93 = vector.multi_reduction <add>, %92, %cst_38 [1] : vector<8x8xf32> to vector<8xf32>
    %94 = vector.shape_cast %93 : vector<8xf32> to vector<8x1xf32>
    %95 = tpu.reciprocal %94 {approx = true} : vector<8x1xf32> -> vector<8x1xf32>
    %96 = vector.broadcast %95 : vector<8x1xf32> to vector<8x8xf32>
    %97 = arith.mulf %92, %96 : vector<8x8xf32>
    %98 = arith.truncf %97 : vector<8x8xf32> to vector<8x8xbf16>
    %cst_39 = arith.constant dense<0.000000e+00> : vector<8x128xf32>
    %99 = tpu.matmul %98, %84, %cst_39 {dimension_numbers = #tpu.dot_dimension_numbers<[1], [0], [0], [1], [0, 0, 1, 1], [], []>} : vector<8x8xbf16>, vector<8x128xbf16>, vector<8x128xf32> -> vector<8x128xf32>
    %c0_40 = arith.constant 0 : index
    %c256 = arith.constant 256 : index
    %100 = vector.load %arg17[%c0_40, %c256] : memref<16x512xf32, #tpu.memory_space<vmem>>, vector<8x128xf32>
    tpu.vector_store %arg17[%c0_40, %c256], %99 {strides = array<i32>} : memref<16x512xf32, #tpu.memory_space<vmem>>, vector<8x128xf32>,
    %101 = vector.extract_strided_slice %25 {offsets = [0, 384], sizes = [8, 128], strides = [1, 1]} : vector<16x512xf32> to vector<8x128xf32>
    %102 = arith.truncf %101 : vector<8x128xf32> to vector<8x128xbf16>
    %103 = vector.extract_strided_slice %5 {offsets = [0, 512], sizes = [8, 128], strides = [1, 1]} : vector<16x1152xf32> to vector<8x128xf32>
    %104 = arith.truncf %103 : vector<8x128xf32> to vector<8x128xbf16>
    %105 = vector.extract_strided_slice %5 {offsets = [0, 1024], sizes = [8, 128], strides = [1, 1]} : vector<16x1152xf32> to vector<8x128xf32>
    %106 = arith.truncf %105 : vector<8x128xf32> to vector<8x128xbf16>
    %cst_41 = arith.constant dense<0.000000e+00> : vector<8x8xf32>
    %107 = tpu.matmul %102, %104, %cst_41 {dimension_numbers = #tpu.dot_dimension_numbers<[1], [1], [0], [0], [0, 0, 1, 0], [], []>} : vector<8x128xbf16>, vector<8x128xbf16>, vector<8x8xf32> -> vector<8x8xf32>
    %cst_42 = arith.constant -4.2949673E+9 : f32
    %108 = vector.broadcast %cst_42 : f32 to vector<8x8xf32>
    %109 = arith.select %34, %108, %107 : vector<8x8xi1>, vector<8x8xf32>
    %cst_43 = arith.constant dense<0xFF800000> : vector<8xf32>
    %110 = vector.multi_reduction <maximumf>, %109, %cst_43 [1] : vector<8x8xf32> to vector<8xf32>
    %111 = vector.shape_cast %110 : vector<8xf32> to vector<8x1xf32>
    %112 = vector.broadcast %111 : vector<8x1xf32> to vector<8x8xf32>
    %113 = arith.subf %109, %112 : vector<8x8xf32>
    %114 = math.exp %113 : vector<8x8xf32>
    %cst_44 = arith.constant dense<0.000000e+00> : vector<8xf32>
    %115 = vector.multi_reduction <add>, %114, %cst_44 [1] : vector<8x8xf32> to vector<8xf32>
    %116 = vector.shape_cast %115 : vector<8xf32> to vector<8x1xf32>
    %117 = tpu.reciprocal %116 {approx = true} : vector<8x1xf32> -> vector<8x1xf32>
    %118 = vector.broadcast %117 : vector<8x1xf32> to vector<8x8xf32>
    %119 = arith.mulf %114, %118 : vector<8x8xf32>
    %120 = arith.truncf %119 : vector<8x8xf32> to vector<8x8xbf16>
    %cst_45 = arith.constant dense<0.000000e+00> : vector<8x128xf32>
    %121 = tpu.matmul %120, %106, %cst_45 {dimension_numbers = #tpu.dot_dimension_numbers<[1], [0], [0], [1], [0, 0, 1, 1], [], []>} : vector<8x8xbf16>, vector<8x128xbf16>, vector<8x128xf32> -> vector<8x128xf32>
    %c0_46 = arith.constant 0 : index
    %c384 = arith.constant 384 : index
    %122 = vector.load %arg17[%c0_46, %c384] : memref<16x512xf32, #tpu.memory_space<vmem>>, vector<8x128xf32>
    tpu.vector_store %arg17[%c0_46, %c384], %121 {strides = array<i32>} : memref<16x512xf32, #tpu.memory_space<vmem>>, vector<8x128xf32>,
    %123 = vector.extract_strided_slice %29 {offsets = [8, 0], sizes = [8, 1], strides = [1, 1]} : vector<16x1xf32> to vector<8x1xf32>
    %cst_47 = arith.constant 5.000000e-01 : f32
    %124 = vector.broadcast %cst_47 : f32 to vector<8x1xf32>
    %125 = arith.cmpf ogt, %123, %124 : vector<8x1xf32>
    %126 = vector.broadcast %125 : vector<8x1xi1> to vector<8x8xi1>
    %127 = arith.ori %28, %126 : vector<8x8xi1>
    %128 = vector.extract_strided_slice %25 {offsets = [8, 0], sizes = [8, 128], strides = [1, 1]} : vector<16x512xf32> to vector<8x128xf32>
    %129 = arith.truncf %128 : vector<8x128xf32> to vector<8x128xbf16>
    %130 = vector.extract_strided_slice %5 {offsets = [8, 128], sizes = [8, 128], strides = [1, 1]} : vector<16x1152xf32> to vector<8x128xf32>
    %131 = arith.truncf %130 : vector<8x128xf32> to vector<8x128xbf16>
    %132 = vector.extract_strided_slice %5 {offsets = [8, 640], sizes = [8, 128], strides = [1, 1]} : vector<16x1152xf32> to vector<8x128xf32>
    %133 = arith.truncf %132 : vector<8x128xf32> to vector<8x128xbf16>
    %cst_48 = arith.constant dense<0.000000e+00> : vector<8x8xf32>
    %134 = tpu.matmul %129, %131, %cst_48 {dimension_numbers = #tpu.dot_dimension_numbers<[1], [1], [0], [0], [0, 0, 1, 0], [], []>} : vector<8x128xbf16>, vector<8x128xbf16>, vector<8x8xf32> -> vector<8x8xf32>
    %cst_49 = arith.constant -4.2949673E+9 : f32
    %135 = vector.broadcast %cst_49 : f32 to vector<8x8xf32>
    %136 = arith.select %127, %135, %134 : vector<8x8xi1>, vector<8x8xf32>
    %cst_50 = arith.constant dense<0xFF800000> : vector<8xf32>
    %137 = vector.multi_reduction <maximumf>, %136, %cst_50 [1] : vector<8x8xf32> to vector<8xf32>
    %138 = vector.shape_cast %137 : vector<8xf32> to vector<8x1xf32>
    %139 = vector.broadcast %138 : vector<8x1xf32> to vector<8x8xf32>
    %140 = arith.subf %136, %139 : vector<8x8xf32>
    %141 = math.exp %140 : vector<8x8xf32>
    %cst_51 = arith.constant dense<0.000000e+00> : vector<8xf32>
    %142 = vector.multi_reduction <add>, %141, %cst_51 [1] : vector<8x8xf32> to vector<8xf32>
    %143 = vector.shape_cast %142 : vector<8xf32> to vector<8x1xf32>
    %144 = tpu.reciprocal %143 {approx = true} : vector<8x1xf32> -> vector<8x1xf32>
    %145 = vector.broadcast %144 : vector<8x1xf32> to vector<8x8xf32>
    %146 = arith.mulf %141, %145 : vector<8x8xf32>
    %147 = arith.truncf %146 : vector<8x8xf32> to vector<8x8xbf16>
    %cst_52 = arith.constant dense<0.000000e+00> : vector<8x128xf32>
    %148 = tpu.matmul %147, %133, %cst_52 {dimension_numbers = #tpu.dot_dimension_numbers<[1], [0], [0], [1], [0, 0, 1, 1], [], []>} : vector<8x8xbf16>, vector<8x128xbf16>, vector<8x128xf32> -> vector<8x128xf32>
    %c8 = arith.constant 8 : index
    %c0_53 = arith.constant 0 : index
    %149 = vector.load %arg17[%c8, %c0_53] : memref<16x512xf32, #tpu.memory_space<vmem>>, vector<8x128xf32>
    tpu.vector_store %arg17[%c8, %c0_53], %148 {strides = array<i32>} : memref<16x512xf32, #tpu.memory_space<vmem>>, vector<8x128xf32>,
    %150 = vector.extract_strided_slice %25 {offsets = [8, 128], sizes = [8, 128], strides = [1, 1]} : vector<16x512xf32> to vector<8x128xf32>
    %151 = arith.truncf %150 : vector<8x128xf32> to vector<8x128xbf16>
    %152 = vector.extract_strided_slice %5 {offsets = [8, 256], sizes = [8, 128], strides = [1, 1]} : vector<16x1152xf32> to vector<8x128xf32>
    %153 = arith.truncf %152 : vector<8x128xf32> to vector<8x128xbf16>
    %154 = vector.extract_strided_slice %5 {offsets = [8, 768], sizes = [8, 128], strides = [1, 1]} : vector<16x1152xf32> to vector<8x128xf32>
    %155 = arith.truncf %154 : vector<8x128xf32> to vector<8x128xbf16>
    %cst_54 = arith.constant dense<0.000000e+00> : vector<8x8xf32>
    %156 = tpu.matmul %151, %153, %cst_54 {dimension_numbers = #tpu.dot_dimension_numbers<[1], [1], [0], [0], [0, 0, 1, 0], [], []>} : vector<8x128xbf16>, vector<8x128xbf16>, vector<8x8xf32> -> vector<8x8xf32>
    %cst_55 = arith.constant -4.2949673E+9 : f32
    %157 = vector.broadcast %cst_55 : f32 to vector<8x8xf32>
    %158 = arith.select %127, %157, %156 : vector<8x8xi1>, vector<8x8xf32>
    %cst_56 = arith.constant dense<0xFF800000> : vector<8xf32>
    %159 = vector.multi_reduction <maximumf>, %158, %cst_56 [1] : vector<8x8xf32> to vector<8xf32>
    %160 = vector.shape_cast %159 : vector<8xf32> to vector<8x1xf32>
    %161 = vector.broadcast %160 : vector<8x1xf32> to vector<8x8xf32>
    %162 = arith.subf %158, %161 : vector<8x8xf32>
    %163 = math.exp %162 : vector<8x8xf32>
    %cst_57 = arith.constant dense<0.000000e+00> : vector<8xf32>
    %164 = vector.multi_reduction <add>, %163, %cst_57 [1] : vector<8x8xf32> to vector<8xf32>
    %165 = vector.shape_cast %164 : vector<8xf32> to vector<8x1xf32>
    %166 = tpu.reciprocal %165 {approx = true} : vector<8x1xf32> -> vector<8x1xf32>
    %167 = vector.broadcast %166 : vector<8x1xf32> to vector<8x8xf32>
    %168 = arith.mulf %163, %167 : vector<8x8xf32>
    %169 = arith.truncf %168 : vector<8x8xf32> to vector<8x8xbf16>
    %cst_58 = arith.constant dense<0.000000e+00> : vector<8x128xf32>
    %170 = tpu.matmul %169, %155, %cst_58 {dimension_numbers = #tpu.dot_dimension_numbers<[1], [0], [0], [1], [0, 0, 1, 1], [], []>} : vector<8x8xbf16>, vector<8x128xbf16>, vector<8x128xf32> -> vector<8x128xf32>
    %c8_59 = arith.constant 8 : index
    %c128_60 = arith.constant 128 : index
    %171 = vector.load %arg17[%c8_59, %c128_60] : memref<16x512xf32, #tpu.memory_space<vmem>>, vector<8x128xf32>
    tpu.vector_store %arg17[%c8_59, %c128_60], %170 {strides = array<i32>} : memref<16x512xf32, #tpu.memory_space<vmem>>, vector<8x128xf32>,
    %172 = vector.extract_strided_slice %25 {offsets = [8, 256], sizes = [8, 128], strides = [1, 1]} : vector<16x512xf32> to vector<8x128xf32>
    %173 = arith.truncf %172 : vector<8x128xf32> to vector<8x128xbf16>
    %174 = vector.extract_strided_slice %5 {offsets = [8, 384], sizes = [8, 128], strides = [1, 1]} : vector<16x1152xf32> to vector<8x128xf32>
    %175 = arith.truncf %174 : vector<8x128xf32> to vector<8x128xbf16>
    %176 = vector.extract_strided_slice %5 {offsets = [8, 896], sizes = [8, 128], strides = [1, 1]} : vector<16x1152xf32> to vector<8x128xf32>
    %177 = arith.truncf %176 : vector<8x128xf32> to vector<8x128xbf16>
    %cst_61 = arith.constant dense<0.000000e+00> : vector<8x8xf32>
    %178 = tpu.matmul %173, %175, %cst_61 {dimension_numbers = #tpu.dot_dimension_numbers<[1], [1], [0], [0], [0, 0, 1, 0], [], []>} : vector<8x128xbf16>, vector<8x128xbf16>, vector<8x8xf32> -> vector<8x8xf32>
    %cst_62 = arith.constant -4.2949673E+9 : f32
    %179 = vector.broadcast %cst_62 : f32 to vector<8x8xf32>
    %180 = arith.select %127, %179, %178 : vector<8x8xi1>, vector<8x8xf32>
    %cst_63 = arith.constant dense<0xFF800000> : vector<8xf32>
    %181 = vector.multi_reduction <maximumf>, %180, %cst_63 [1] : vector<8x8xf32> to vector<8xf32>
    %182 = vector.shape_cast %181 : vector<8xf32> to vector<8x1xf32>
    %183 = vector.broadcast %182 : vector<8x1xf32> to vector<8x8xf32>
    %184 = arith.subf %180, %183 : vector<8x8xf32>
    %185 = math.exp %184 : vector<8x8xf32>
    %cst_64 = arith.constant dense<0.000000e+00> : vector<8xf32>
    %186 = vector.multi_reduction <add>, %185, %cst_64 [1] : vector<8x8xf32> to vector<8xf32>
    %187 = vector.shape_cast %186 : vector<8xf32> to vector<8x1xf32>
    %188 = tpu.reciprocal %187 {approx = true} : vector<8x1xf32> -> vector<8x1xf32>
    %189 = vector.broadcast %188 : vector<8x1xf32> to vector<8x8xf32>
    %190 = arith.mulf %185, %189 : vector<8x8xf32>
    %191 = arith.truncf %190 : vector<8x8xf32> to vector<8x8xbf16>
    %cst_65 = arith.constant dense<0.000000e+00> : vector<8x128xf32>
    %192 = tpu.matmul %191, %177, %cst_65 {dimension_numbers = #tpu.dot_dimension_numbers<[1], [0], [0], [1], [0, 0, 1, 1], [], []>} : vector<8x8xbf16>, vector<8x128xbf16>, vector<8x128xf32> -> vector<8x128xf32>
    %c8_66 = arith.constant 8 : index
    %c256_67 = arith.constant 256 : index
    %193 = vector.load %arg17[%c8_66, %c256_67] : memref<16x512xf32, #tpu.memory_space<vmem>>, vector<8x128xf32>
    tpu.vector_store %arg17[%c8_66, %c256_67], %192 {strides = array<i32>} : memref<16x512xf32, #tpu.memory_space<vmem>>, vector<8x128xf32>,
    %194 = vector.extract_strided_slice %25 {offsets = [8, 384], sizes = [8, 128], strides = [1, 1]} : vector<16x512xf32> to vector<8x128xf32>
    %195 = arith.truncf %194 : vector<8x128xf32> to vector<8x128xbf16>
    %196 = vector.extract_strided_slice %5 {offsets = [8, 512], sizes = [8, 128], strides = [1, 1]} : vector<16x1152xf32> to vector<8x128xf32>
    %197 = arith.truncf %196 : vector<8x128xf32> to vector<8x128xbf16>
    %198 = vector.extract_strided_slice %5 {offsets = [8, 1024], sizes = [8, 128], strides = [1, 1]} : vector<16x1152xf32> to vector<8x128xf32>
    %199 = arith.truncf %198 : vector<8x128xf32> to vector<8x128xbf16>
    %cst_68 = arith.constant dense<0.000000e+00> : vector<8x8xf32>
    %200 = tpu.matmul %195, %197, %cst_68 {dimension_numbers = #tpu.dot_dimension_numbers<[1], [1], [0], [0], [0, 0, 1, 0], [], []>} : vector<8x128xbf16>, vector<8x128xbf16>, vector<8x8xf32> -> vector<8x8xf32>
    %cst_69 = arith.constant -4.2949673E+9 : f32
    %201 = vector.broadcast %cst_69 : f32 to vector<8x8xf32>
    %202 = arith.select %127, %201, %200 : vector<8x8xi1>, vector<8x8xf32>
    %cst_70 = arith.constant dense<0xFF800000> : vector<8xf32>
    %203 = vector.multi_reduction <maximumf>, %202, %cst_70 [1] : vector<8x8xf32> to vector<8xf32>
    %204 = vector.shape_cast %203 : vector<8xf32> to vector<8x1xf32>
    %205 = vector.broadcast %204 : vector<8x1xf32> to vector<8x8xf32>
    %206 = arith.subf %202, %205 : vector<8x8xf32>
    %207 = math.exp %206 : vector<8x8xf32>
    %cst_71 = arith.constant dense<0.000000e+00> : vector<8xf32>
    %208 = vector.multi_reduction <add>, %207, %cst_71 [1] : vector<8x8xf32> to vector<8xf32>
    %209 = vector.shape_cast %208 : vector<8xf32> to vector<8x1xf32>
    %210 = tpu.reciprocal %209 {approx = true} : vector<8x1xf32> -> vector<8x1xf32>
    %211 = vector.broadcast %210 : vector<8x1xf32> to vector<8x8xf32>
    %212 = arith.mulf %207, %211 : vector<8x8xf32>
    %213 = arith.truncf %212 : vector<8x8xf32> to vector<8x8xbf16>
    %cst_72 = arith.constant dense<0.000000e+00> : vector<8x128xf32>
    %214 = tpu.matmul %213, %199, %cst_72 {dimension_numbers = #tpu.dot_dimension_numbers<[1], [0], [0], [1], [0, 0, 1, 1], [], []>} : vector<8x8xbf16>, vector<8x128xbf16>, vector<8x128xf32> -> vector<8x128xf32>
    %c8_73 = arith.constant 8 : index
    %c384_74 = arith.constant 384 : index
    %215 = vector.load %arg17[%c8_73, %c384_74] : memref<16x512xf32, #tpu.memory_space<vmem>>, vector<8x128xf32>
    tpu.vector_store %arg17[%c8_73, %c384_74], %214 {strides = array<i32>} : memref<16x512xf32, #tpu.memory_space<vmem>>, vector<8x128xf32>,
    %c0_75 = arith.constant 0 : index
    %c0_76 = arith.constant 0 : index
    %216 = vector.load %arg17[%c0_75, %c0_76] : memref<16x512xf32, #tpu.memory_space<vmem>>, vector<16x512xf32>
    %217 = arith.truncf %216 : vector<16x512xf32> to vector<16x512xbf16>
    %c0_77 = arith.constant 0 : index
    %c0_78 = arith.constant 0 : index
    %218 = vector.load %arg9[%c0_77, %c0_78] : memref<512x32xbf16, #tpu.memory_space<vmem>>, vector<512x32xbf16>
    %cst_79 = arith.constant dense<0.000000e+00> : vector<16x32xf32>
    %219 = tpu.matmul %217, %218, %cst_79 {dimension_numbers = #tpu.dot_dimension_numbers<[1], [0], [0], [1], [0, 0, 1, 1], [], []>} : vector<16x512xbf16>, vector<512x32xbf16>, vector<16x32xf32> -> vector<16x32xf32>
    %c0_80 = arith.constant 0 : index
    %c0_81 = arith.constant 0 : index
    %220 = vector.load %arg14[%c0_80, %c0_81] : memref<1x32xf32, #tpu.memory_space<vmem>>, vector<1x32xf32>
    %c0_82 = arith.constant 0 : index
    %c0_83 = arith.constant 0 : index
    %221 = vector.load %arg15[%c0_82, %c0_83] : memref<1x32xf32, #tpu.memory_space<vmem>>, vector<1x32xf32>
    %222 = arith.addf %22, %219 : vector<16x32xf32>
    %cst_84 = arith.constant dense<0.000000e+00> : vector<16xf32>
    %223 = vector.multi_reduction <add>, %222, %cst_84 [1] : vector<16x32xf32> to vector<16xf32>
    %224 = vector.shape_cast %223 : vector<16xf32> to vector<16x1xf32>
    %cst_85 = arith.constant 3.200000e+01 : f32
    %225 = vector.broadcast %cst_85 : f32 to vector<16x1xf32>
    %226 = arith.divf %224, %225 : vector<16x1xf32>
    %227 = vector.broadcast %226 : vector<16x1xf32> to vector<16x32xf32>
    %228 = arith.subf %222, %227 : vector<16x32xf32>
    %229 = arith.mulf %228, %228 : vector<16x32xf32>
    %cst_86 = arith.constant dense<0.000000e+00> : vector<16xf32>
    %230 = vector.multi_reduction <add>, %229, %cst_86 [1] : vector<16x32xf32> to vector<16xf32>
    %231 = vector.shape_cast %230 : vector<16xf32> to vector<16x1xf32>
    %cst_87 = arith.constant 3.200000e+01 : f32
    %232 = vector.broadcast %cst_87 : f32 to vector<16x1xf32>
    %233 = arith.divf %231, %232 : vector<16x1xf32>
    %234 = vector.broadcast %226 : vector<16x1xf32> to vector<16x32xf32>
    %235 = arith.subf %222, %234 : vector<16x32xf32>
    %cst_88 = arith.constant 9.99999974E-6 : f32
    %236 = vector.broadcast %cst_88 : f32 to vector<16x1xf32>
    %237 = arith.addf %233, %236 : vector<16x1xf32>
    %238 = math.rsqrt %237 : vector<16x1xf32>
    %239 = vector.broadcast %238 : vector<16x1xf32> to vector<16x32xf32>
    %240 = arith.mulf %235, %239 : vector<16x32xf32>
    %241 = vector.broadcast %220 : vector<1x32xf32> to vector<16x32xf32>
    %242 = arith.mulf %240, %241 : vector<16x32xf32>
    %243 = vector.broadcast %221 : vector<1x32xf32> to vector<16x32xf32>
    %244 = arith.addf %242, %243 : vector<16x32xf32>
    %245 = arith.truncf %244 : vector<16x32xf32> to vector<16x32xbf16>
    %c0_89 = arith.constant 0 : index
    %c0_90 = arith.constant 0 : index
    %246 = vector.load %arg10[%c0_89, %c0_90] : memref<32x32xbf16, #tpu.memory_space<vmem>>, vector<32x32xbf16>
    %cst_91 = arith.constant dense<0.000000e+00> : vector<16x32xf32>
    %247 = tpu.matmul %245, %246, %cst_91 {dimension_numbers = #tpu.dot_dimension_numbers<[1], [0], [0], [1], [0, 0, 1, 1], [], []>} : vector<16x32xbf16>, vector<32x32xbf16>, vector<16x32xf32> -> vector<16x32xf32>
    %c0_92 = arith.constant 0 : index
    %c0_93 = arith.constant 0 : index
    %248 = vector.load %arg11[%c0_92, %c0_93] : memref<1x32xf32, #tpu.memory_space<vmem>>, vector<1x32xf32>
    %249 = vector.broadcast %248 : vector<1x32xf32> to vector<16x32xf32>
    %250 = arith.addf %247, %249 : vector<16x32xf32>
    %cst_94 = arith.constant 0.000000e+00 : f32
    %251 = vector.broadcast %cst_94 : f32 to vector<16x32xf32>
    %252 = arith.maximumf %250, %251 : vector<16x32xf32>
    %253 = arith.truncf %252 : vector<16x32xf32> to vector<16x32xbf16>
    %c0_95 = arith.constant 0 : index
    %c0_96 = arith.constant 0 : index
    %254 = vector.load %arg12[%c0_95, %c0_96] : memref<32x32xbf16, #tpu.memory_space<vmem>>, vector<32x32xbf16>
    %cst_97 = arith.constant dense<0.000000e+00> : vector<16x32xf32>
    %255 = tpu.matmul %253, %254, %cst_97 {dimension_numbers = #tpu.dot_dimension_numbers<[1], [0], [0], [1], [0, 0, 1, 1], [], []>} : vector<16x32xbf16>, vector<32x32xbf16>, vector<16x32xf32> -> vector<16x32xf32>
    %c0_98 = arith.constant 0 : index
    %c0_99 = arith.constant 0 : index
    %256 = vector.load %arg13[%c0_98, %c0_99] : memref<1x32xf32, #tpu.memory_space<vmem>>, vector<1x32xf32>
    %257 = vector.broadcast %256 : vector<1x32xf32> to vector<16x32xf32>
    %258 = arith.addf %255, %257 : vector<16x32xf32>
    %259 = arith.addf %258, %244 : vector<16x32xf32>
    %cst_100 = arith.constant dense<0.000000e+00> : vector<16xf32>
    %260 = vector.multi_reduction <add>, %259, %cst_100 [1] : vector<16x32xf32> to vector<16xf32>
    %261 = vector.shape_cast %260 : vector<16xf32> to vector<16x1xf32>
    %cst_101 = arith.constant 3.200000e+01 : f32
    %262 = vector.broadcast %cst_101 : f32 to vector<16x1xf32>
    %263 = arith.divf %261, %262 : vector<16x1xf32>
    %264 = vector.broadcast %263 : vector<16x1xf32> to vector<16x32xf32>
    %265 = arith.subf %259, %264 : vector<16x32xf32>
    %266 = arith.mulf %265, %265 : vector<16x32xf32>
    %cst_102 = arith.constant dense<0.000000e+00> : vector<16xf32>
    %267 = vector.multi_reduction <add>, %266, %cst_102 [1] : vector<16x32xf32> to vector<16xf32>
    %268 = vector.shape_cast %267 : vector<16xf32> to vector<16x1xf32>
    %cst_103 = arith.constant 3.200000e+01 : f32
    %269 = vector.broadcast %cst_103 : f32 to vector<16x1xf32>
    %270 = arith.divf %268, %269 : vector<16x1xf32>
    %271 = vector.broadcast %263 : vector<16x1xf32> to vector<16x32xf32>
    %272 = arith.subf %259, %271 : vector<16x32xf32>
    %cst_104 = arith.constant 9.99999974E-6 : f32
    %273 = vector.broadcast %cst_104 : f32 to vector<16x1xf32>
    %274 = arith.addf %270, %273 : vector<16x1xf32>
    %275 = math.rsqrt %274 : vector<16x1xf32>
    %276 = vector.broadcast %275 : vector<16x1xf32> to vector<16x32xf32>
    %277 = arith.mulf %272, %276 : vector<16x32xf32>
    %278 = vector.broadcast %220 : vector<1x32xf32> to vector<16x32xf32>
    %279 = arith.mulf %277, %278 : vector<16x32xf32>
    %280 = vector.broadcast %221 : vector<1x32xf32> to vector<16x32xf32>
    %281 = arith.addf %279, %280 : vector<16x32xf32>
    %c0_105 = arith.constant 0 : index
    %c0_106 = arith.constant 0 : index
    %282 = vector.load %arg16[%c0_105, %c0_106] : memref<16x32xf32, #tpu.memory_space<vmem>>, vector<16x32xf32>
    tpu.vector_store %arg16[%c0_105, %c0_106], %281 {strides = array<i32>} : memref<16x32xf32, #tpu.memory_space<vmem>>, vector<16x32xf32>,
    return
  }
  func.func @transform_0(%arg0: i32) -> (i32, i32) {
    %c0_i32 = arith.constant 0 : i32
    %c0_i32_0 = arith.constant 0 : i32
    %c0_i32_1 = arith.constant 0 : i32
    return %c0_i32, %c0_i32_0 : i32, i32
  }
  func.func @transform_1(%arg0: i32) -> (i32, i32) {
    %c0_i32 = arith.constant 0 : i32
    %c0_i32_0 = arith.constant 0 : i32
    %c0_i32_1 = arith.constant 0 : i32
    return %c0_i32, %c0_i32_0 : i32, i32
  }
  func.func @transform_2(%arg0: i32) -> (i32, i32) {
    %c0_i32 = arith.constant 0 : i32
    %c0_i32_0 = arith.constant 0 : i32
    %c0_i32_1 = arith.constant 0 : i32
    return %c0_i32, %c0_i32_0 : i32, i32
  }
  func.func @transform_3(%arg0: i32) -> (i32, i32) {
    %c0_i32 = arith.constant 0 : i32
    %c0_i32_0 = arith.constant 0 : i32
    %c0_i32_1 = arith.constant 0 : i32
    return %c0_i32, %c0_i32_0 : i32, i32
  }
  func.func @transform_4(%arg0: i32) -> (i32, i32) {
    %c0_i32 = arith.constant 0 : i32
    %c0_i32_0 = arith.constant 0 : i32
    %c0_i32_1 = arith.constant 0 : i32
    return %c0_i32, %c0_i32_0 : i32, i32
  }
  func.func @transform_5(%arg0: i32) -> (i32, i32) {
    %c0_i32 = arith.constant 0 : i32
    %c0_i32_0 = arith.constant 0 : i32
    %c0_i32_1 = arith.constant 0 : i32
    return %c0_i32, %c0_i32_0 : i32, i32
  }
  func.func @transform_6(%arg0: i32) -> (i32, i32) {
    %c0_i32 = arith.constant 0 : i32
    %c0_i32_0 = arith.constant 0 : i32
    %c0_i32_1 = arith.constant 0 : i32
    return %c0_i32, %c0_i32_0 : i32, i32
  }
  func.func @transform_7(%arg0: i32) -> (i32, i32) {
    %c0_i32 = arith.constant 0 : i32
    %c0_i32_0 = arith.constant 0 : i32
    %c0_i32_1 = arith.constant 0 : i32
    return %c0_i32, %c0_i32_0 : i32, i32
  }
  func.func @transform_8(%arg0: i32) -> (i32, i32) {
    %c0_i32 = arith.constant 0 : i32
    %c0_i32_0 = arith.constant 0 : i32
    %c0_i32_1 = arith.constant 0 : i32
    return %c0_i32, %c0_i32_0 : i32, i32
  }
  func.func @transform_9(%arg0: i32) -> (i32, i32) {
    %c0_i32 = arith.constant 0 : i32
    %c0_i32_0 = arith.constant 0 : i32
    %c0_i32_1 = arith.constant 0 : i32
    return %c0_i32, %c0_i32_0 : i32, i32
  }
  func.func @transform_10(%arg0: i32) -> (i32, i32) {
    %c0_i32 = arith.constant 0 : i32
    %c0_i32_0 = arith.constant 0 : i32
    %c0_i32_1 = arith.constant 0 : i32
    return %c0_i32, %c0_i32_0 : i32, i32
  }
  func.func @transform_11(%arg0: i32) -> (i32, i32) {
    %c0_i32 = arith.constant 0 : i32
    %c0_i32_0 = arith.constant 0 : i32
    %c0_i32_1 = arith.constant 0 : i32
    return %c0_i32, %c0_i32_0 : i32, i32
  }
  func.func @transform_12(%arg0: i32) -> (i32, i32) {
    %c0_i32 = arith.constant 0 : i32
    %c0_i32_0 = arith.constant 0 : i32
    %c0_i32_1 = arith.constant 0 : i32
    return %c0_i32, %c0_i32_0 : i32, i32
  }
  func.func @transform_13(%arg0: i32) -> (i32, i32) {
    %c0_i32 = arith.constant 0 : i32
    %c0_i32_0 = arith.constant 0 : i32
    %c0_i32_1 = arith.constant 0 : i32
    return %c0_i32, %c0_i32_0 : i32, i32
  }
  func.func @transform_14(%arg0: i32) -> (i32, i32) {
    %c0_i32 = arith.constant 0 : i32
    %c0_i32_0 = arith.constant 0 : i32
    %c0_i32_1 = arith.constant 0 : i32
    return %c0_i32, %c0_i32_0 : i32, i32
  }
  func.func @transform_15(%arg0: i32) -> (i32, i32) {
    %c0_i32 = arith.constant 0 : i32
    %c0_i32_0 = arith.constant 0 : i32
    %c0_i32_1 = arith.constant 0 : i32
    return %c0_i32, %c0_i32_0 : i32, i32
  }
}

</mosaic_0001>

<llo_original>
// kernel: tpu_custom_call.1
$region0: #{tpu_custom_call.1}
  #allocation0 [shape = 'u32[]', space=smem, size = 0x4, offset = 0x4, fixed_abs, tag = 'smem constant byte address 0x4 - core index']
  #allocation1 [shape = 'u32[144,128]{1,0:T(1,128)}', space=vmem, size = 0x12000, scoped, tag = 'internal scratch']
  #allocation2 [shape = 'f32[16,512]{1,0:T(8,128)}', space=vmem, size = 0x8000, scoped, tag = 'scratch operand']
  %s0 = inlined_call_operand.vmem [shape: f32[16,32], index: 0, kind: input, shape index: {}]
  %s1 = inlined_call_operand.vmem [shape: f32[8,8], index: 1, kind: input, shape index: {}]
  %s2 = inlined_call_operand.vmem [shape: f32[16,1], index: 2, kind: input, shape index: {}]
  %s3 = inlined_call_operand.vmem [shape: bf16[16,16], index: 3, kind: input, shape index: {}]
  %s4 = inlined_call_operand.vmem [shape: bf16[32,1152], index: 4, kind: input, shape index: {}]
  %s5 = inlined_call_operand.vmem [shape: bf16[32,32], index: 5, kind: input, shape index: {}]
  %s6 = inlined_call_operand.vmem [shape: f32[1,32], index: 6, kind: input, shape index: {}]
  %s7 = inlined_call_operand.vmem [shape: bf16[32,512], index: 7, kind: input, shape index: {}]
  %s8 = inlined_call_operand.vmem [shape: bf16[512,32], index: 8, kind: input, shape index: {}]
  %s9 = inlined_call_operand.vmem [shape: bf16[32,32], index: 9, kind: input, shape index: {}]
  %s10 = inlined_call_operand.vmem [shape: f32[1,32], index: 10, kind: input, shape index: {}]
  %s11 = inlined_call_operand.vmem [shape: bf16[32,32], index: 11, kind: input, shape index: {}]
  %s12 = inlined_call_operand.vmem [shape: f32[1,32], index: 12, kind: input, shape index: {}]
  %s13 = inlined_call_operand.vmem [shape: f32[1,32], index: 13, kind: input, shape index: {}]
  %s14 = inlined_call_operand.vmem [shape: f32[1,32], index: 14, kind: input, shape index: {}]
  %s15 = inlined_call_operand.hbm [shape: f32[16,32], index: 15, kind: output, shape index: {}]
  %s16 = sld [smem:[#allocation0]]
  $region70: #{tpu_custom_call.1} parent=0
    _
  %s18 = ssub.s32 1, %s16
  %s19 = scalar_select 0, %s18, %s16
  $region1: #{tpu_custom_call.1} parent=0
    #allocation3 [shape = 'u8[8192]{0}', space=vmem, size = 0x2000, scoped, tag = 'output window, operand 0, single buffered']
    #allocation4 [shape = 's32[1]{0}', space=sflag, size = 0x4, scoped, tag = 'scoped memory for tpu_custom_call.1']
    %20 = vsyncpa [#allocation4], 0
    // Predicated region
    $region2: #{tpu_custom_call.1} parent=1 // pred_check
      _
    $region3: #{tpu_custom_call.1} parent=1 // pred_check_branch
      %22 = sbr.rel (0) target = $region5
    $region4: #{tpu_custom_call.1} parent=1 // pred_region
      _
    $region5: #{tpu_custom_call.1} parent=1 // pred_fallthru
      _
    // Predicated region
    $region6: #{tpu_custom_call.1} parent=1 // pred_check
      _
    $region7: #{tpu_custom_call.1} parent=1 // pred_check_branch
      %24 = sbr.rel (0) target = $region9
    $region8: #{tpu_custom_call.1} parent=1 // pred_region
      _
    $region9: #{tpu_custom_call.1} parent=1 // pred_fallthru
      _
    // Predicated region
    $region10: #{tpu_custom_call.1} parent=1 // pred_check
      _
    $region11: #{tpu_custom_call.1} parent=1 // pred_check_branch
      %26 = sbr.rel (0) target = $region13
    $region12: #{tpu_custom_call.1} parent=1 // pred_region
      _
    $region13: #{tpu_custom_call.1} parent=1 // pred_fallthru
      _
    // Predicated region
    $region14: #{tpu_custom_call.1} parent=1 // pred_check
      _
    $region15: #{tpu_custom_call.1} parent=1 // pred_check_branch
      %28 = sbr.rel (0) target = $region17
    $region16: #{tpu_custom_call.1} parent=1 // pred_region
      _
    $region17: #{tpu_custom_call.1} parent=1 // pred_fallthru
      _
    // Predicated region
    $region18: #{tpu_custom_call.1} parent=1 // pred_check
      _
    $region19: #{tpu_custom_call.1} parent=1 // pred_check_branch
      %30 = sbr.rel (0) target = $region21
    $region20: #{tpu_custom_call.1} parent=1 // pred_region
      _
    $region21: #{tpu_custom_call.1} parent=1 // pred_fallthru
      _
    // Predicated region
    $region22: #{tpu_custom_call.1} parent=1 // pred_check
      _
    $region23: #{tpu_custom_call.1} parent=1 // pred_check_branch
      %32 = sbr.rel (0) target = $region25
    $region24: #{tpu_custom_call.1} parent=1 // pred_region
      _
    $region25: #{tpu_custom_call.1} parent=1 // pred_fallthru
      _
    // Predicated region
    $region26: #{tpu_custom_call.1} parent=1 // pred_check
      _
    $region27: #{tpu_custom_call.1} parent=1 // pred_check_branch
      %34 = sbr.rel (0) target = $region29
    $region28: #{tpu_custom_call.1} parent=1 // pred_region
      _
    $region29: #{tpu_custom_call.1} parent=1 // pred_fallthru
      _
    // Predicated region
    $region30: #{tpu_custom_call.1} parent=1 // pred_check
      _
    $region31: #{tpu_custom_call.1} parent=1 // pred_check_branch
      %36 = sbr.rel (0) target = $region33
    $region32: #{tpu_custom_call.1} parent=1 // pred_region
      _
    $region33: #{tpu_custom_call.1} parent=1 // pred_fallthru
      _
    // Predicated region
    $region34: #{tpu_custom_call.1} parent=1 // pred_check
      _
    $region35: #{tpu_custom_call.1} parent=1 // pred_check_branch
      %38 = sbr.rel (0) target = $region37
    $region36: #{tpu_custom_call.1} parent=1 // pred_region
      _
    $region37: #{tpu_custom_call.1} parent=1 // pred_fallthru
      _
    // Predicated region
    $region38: #{tpu_custom_call.1} parent=1 // pred_check
      _
    $region39: #{tpu_custom_call.1} parent=1 // pred_check_branch
      %40 = sbr.rel (0) target = $region41
    $region40: #{tpu_custom_call.1} parent=1 // pred_region
      _
    $region41: #{tpu_custom_call.1} parent=1 // pred_fallthru
      _
    // Predicated region
    $region42: #{tpu_custom_call.1} parent=1 // pred_check
      _
    $region43: #{tpu_custom_call.1} parent=1 // pred_check_branch
      %42 = sbr.rel (0) target = $region45
    $region44: #{tpu_custom_call.1} parent=1 // pred_region
      _
    $region45: #{tpu_custom_call.1} parent=1 // pred_fallthru
      _
    // Predicated region
    $region46: #{tpu_custom_call.1} parent=1 // pred_check
      _
    $region47: #{tpu_custom_call.1} parent=1 // pred_check_branch
      %44 = sbr.rel (0) target = $region49
    $region48: #{tpu_custom_call.1} parent=1 // pred_region
      _
    $region49: #{tpu_custom_call.1} parent=1 // pred_fallthru
      _
    // Predicated region
    $region50: #{tpu_custom_call.1} parent=1 // pred_check
      _
    $region51: #{tpu_custom_call.1} parent=1 // pred_check_branch
      %46 = sbr.rel (0) target = $region53
    $region52: #{tpu_custom_call.1} parent=1 // pred_region
      _
    $region53: #{tpu_custom_call.1} parent=1 // pred_fallthru
      _
    // Predicated region
    $region54: #{tpu_custom_call.1} parent=1 // pred_check
      _
    $region55: #{tpu_custom_call.1} parent=1 // pred_check_branch
      %48 = sbr.rel (0) target = $region57
    $region56: #{tpu_custom_call.1} parent=1 // pred_region
      _
    $region57: #{tpu_custom_call.1} parent=1 // pred_fallthru
      _
    // Predicated region
    $region58: #{tpu_custom_call.1} parent=1 // pred_check
      _
    $region59: #{tpu_custom_call.1} parent=1 // pred_check_branch
      %50 = sbr.rel (0) target = $region61
    $region60: #{tpu_custom_call.1} parent=1 // pred_region
      _
    $region61: #{tpu_custom_call.1} parent=1 // pred_fallthru
      _
    %v52 = vld [vmem:[%s0] sm:$0xff]
    %v53 = vld [vmem:[%s0 + $0x8] sm:$0xff]
    %v54 = vpack.c.bf16 %v53, %v52
    %v55 = vld [vmem:[%s3] sm:$0xf]
    %v56 = vld [vmem:[%s3 + $0x4] sm:$0xf]
    %v59 = vunpack.c.l.b16 %v55
    %v60 = vunpack.c.l.b16 %v56
    %v61 = vpack.c.b16 %v60, %v59
    %vm62 = vcmask 130048
    %v64 = vsel %vm62, %v61, 0
    %66 = vmatprep.subr.bf16.mxu0 0
    %67 = vmatpush1.bf16.msra.mxu0 0
    %68 = vmatprep.subr.bf16.mxu0 0
    %69 = vmatpush1.bf16.msra.mxu0 0
    %70 = vmatprep.subr.bf16.mxu0 0
    %71 = vmatpush1.bf16.msra.mxu0 0
    %72 = vmatprep.subr.bf16.mxu0 0
    %73 = vmatpush1.bf16.msra.mxu0 0
    %74 = vmatprep.subr.bf16.mxu0 0
    %75 = vmatpush1.bf16.msra.mxu0 0
    %76 = vmatprep.subr.bf16.mxu0 0
    %77 = vmatpush1.bf16.msra.mxu0 0
    %78 = vmatprep.subr.bf16.mxu0 0
    %79 = vmatpush1.bf16.msra.mxu0 0
    %80 = vmatprep.subr.bf16.mxu0 0
    %81 = vmatpush1.bf16.msra.mxu0 %v54
    %82 = vmatprep.subr.bf16.mxu0 0
    %83 = vmatpush2.bf16.msra.mxu0 0
    %84 = vmatprep.subr.bf16.mxu0 0
    %85 = vmatpush2.bf16.msra.mxu0 0
    %86 = vmatprep.subr.bf16.mxu0 0
    %87 = vmatpush2.bf16.msra.mxu0 0
    %88 = vmatprep.subr.bf16.mxu0 0
    %89 = vmatpush2.bf16.msra.mxu0 0
    %90 = vmatprep.subr.bf16.mxu0 0
    %91 = vmatpush2.bf16.msra.mxu0 0
    %92 = vmatprep.subr.bf16.mxu0 0
    %93 = vmatpush2.bf16.msra.mxu0 0
    %94 = vmatprep.subr.bf16.mxu0 0
    %95 = vmatpush2.bf16.msra.mxu0 0
    %96 = vmatprep.subr.bf16.mxu0 0
    %97 = vmatpush2.bf16.msra.mxu0 0
    %98 = vmatprep.mubr.bf16.mxu0 0
    %99 = vmatmul.mubr.bf16.gmra.mxu0 %v64
    %v100 = vpop.f32.mrf.mxu0
    %v101 = vadd.f32 0.0, %v100
    %v102 = vpop.f32.mrf.mxu0
    %v103 = vpop.f32.mrf.mxu0
    %v104 = vadd.f32 0.0, %v103
    %v105 = vpop.f32.mrf.mxu0
    %106 = vdwg.mxu0
    %v107 = vld [vmem:[%s4] sm:$0xff]
    %v108 = vld [vmem:[%s4 + $0x8] sm:$0xff]
    %v109 = vld [vmem:[%s4 + $0x10] sm:$0xff]
    %v110 = vld [vmem:[%s4 + $0x18] sm:$0xff]
    %v111 = vld [vmem:[%s4 + $0x20] sm:$0xf]
    %v112 = vld [vmem:[%s4 + $0x24] sm:$0xff]
    %v113 = vld [vmem:[%s4 + $0x2c] sm:$0xff]
    %v114 = vld [vmem:[%s4 + $0x34] sm:$0xff]
    %v115 = vld [vmem:[%s4 + $0x3c] sm:$0xff]
    %v116 = vld [vmem:[%s4 + $0x44] sm:$0xf]
    %v117 = vld [vmem:[%s4 + $0x48] sm:$0xff]
    %v118 = vld [vmem:[%s4 + $0x50] sm:$0xff]
    %v119 = vld [vmem:[%s4 + $0x58] sm:$0xff]
    %v120 = vld [vmem:[%s4 + $0x60] sm:$0xff]
    %v121 = vld [vmem:[%s4 + $0x68] sm:$0xf]
    %v122 = vld [vmem:[%s4 + $0x6c] sm:$0xff]
    %v123 = vld [vmem:[%s4 + $0x74] sm:$0xff]
    %v124 = vld [vmem:[%s4 + $0x7c] sm:$0xff]
    %v125 = vld [vmem:[%s4 + $0x84] sm:$0xff]
    %v126 = vld [vmem:[%s4 + $0x8c] sm:$0xf]
    %v147 = vunpack.c.l.b16 %v107
    %v148 = vunpack.c.h.b16 %v107
    %v149 = vunpack.c.l.b16 %v108
    %v150 = vunpack.c.h.b16 %v108
    %v151 = vunpack.c.l.b16 %v109
    %v152 = vunpack.c.h.b16 %v109
    %v153 = vunpack.c.l.b16 %v110
    %v154 = vunpack.c.h.b16 %v110
    %v155 = vunpack.c.l.b16 %v111
    %v156 = vunpack.c.l.b16 %v112
    %v157 = vunpack.c.h.b16 %v112
    %v158 = vunpack.c.l.b16 %v113
    %v159 = vunpack.c.h.b16 %v113
    %v160 = vunpack.c.l.b16 %v114
    %v161 = vunpack.c.h.b16 %v114
    %v162 = vunpack.c.l.b16 %v115
    %v163 = vunpack.c.h.b16 %v115
    %v164 = vunpack.c.l.b16 %v116
    %v165 = vunpack.c.l.b16 %v117
    %v166 = vunpack.c.h.b16 %v117
    %v167 = vunpack.c.l.b16 %v118
    %v168 = vunpack.c.h.b16 %v118
    %v169 = vunpack.c.l.b16 %v119
    %v170 = vunpack.c.h.b16 %v119
    %v171 = vunpack.c.l.b16 %v120
    %v172 = vunpack.c.h.b16 %v120
    %v173 = vunpack.c.l.b16 %v121
    %v174 = vunpack.c.l.b16 %v122
    %v175 = vunpack.c.h.b16 %v122
    %v176 = vunpack.c.l.b16 %v123
    %v177 = vunpack.c.h.b16 %v123
    %v178 = vunpack.c.l.b16 %v124
    %v179 = vunpack.c.h.b16 %v124
    %v180 = vunpack.c.l.b16 %v125
    %v181 = vunpack.c.h.b16 %v125
    %v182 = vunpack.c.l.b16 %v126
    %v183 = vpack.c.b16 %v156, %v147
    %v184 = vpack.c.b16 %v157, %v148
    %v185 = vpack.c.b16 %v158, %v149
    %v186 = vpack.c.b16 %v159, %v150
    %v187 = vpack.c.b16 %v160, %v151
    %v188 = vpack.c.b16 %v161, %v152
    %v189 = vpack.c.b16 %v162, %v153
    %v190 = vpack.c.b16 %v163, %v154
    %v191 = vpack.c.b16 %v164, %v155
    %v192 = vpack.c.b16 %v174, %v165
    %v193 = vpack.c.b16 %v175, %v166
    %v194 = vpack.c.b16 %v176, %v167
    %v195 = vpack.c.b16 %v177, %v168
    %v196 = vpack.c.b16 %v178, %v169
    %v197 = vpack.c.b16 %v179, %v170
    %v198 = vpack.c.b16 %v180, %v171
    %v199 = vpack.c.b16 %v181, %v172
    %v200 = vpack.c.b16 %v182, %v173
    %vm219 = vcmask 261120
    %v221 = vsel %vm219, %v54, 0
    %223 = vmatprep.subr.bf16.mxu0 0
    %224 = vmatpush1.bf16.msra.mxu0 0
    %225 = vmatprep.subr.bf16.mxu0 0
    %226 = vmatpush1.bf16.msra.mxu0 0
    %227 = vmatprep.subr.bf16.mxu0 0
    %228 = vmatpush1.bf16.msra.mxu0 0
    %229 = vmatprep.subr.bf16.mxu0 0
    %230 = vmatpush1.bf16.msra.mxu0 0
    %231 = vmatprep.subr.bf16.mxu0 0
    %232 = vmatpush1.bf16.msra.mxu0 0
    %233 = vmatprep.subr.bf16.mxu0 0
    %234 = vmatpush1.bf16.msra.mxu0 0
    %235 = vmatprep.subr.bf16.mxu0 %v193
    %236 = vmatpush1.bf16.msra.mxu0 %v192
    %237 = vmatprep.subr.bf16.mxu0 %v184
    %238 = vmatpush1.bf16.msra.mxu0 %v183
    %239 = vmatprep.subr.bf16.mxu0 0
    %240 = vmatpush2.bf16.msra.mxu0 0
    %241 = vmatprep.subr.bf16.mxu0 0
    %242 = vmatpush2.bf16.msra.mxu0 0
    %243 = vmatprep.subr.bf16.mxu0 0
    %244 = vmatpush2.bf16.msra.mxu0 0
    %245 = vmatprep.subr.bf16.mxu0 0
    %246 = vmatpush2.bf16.msra.mxu0 0
    %247 = vmatprep.subr.bf16.mxu0 0
    %248 = vmatpush2.bf16.msra.mxu0 0
    %249 = vmatprep.subr.bf16.mxu0 0
    %250 = vmatpush2.bf16.msra.mxu0 0
    %251 = vmatprep.subr.bf16.mxu0 0
    %252 = vmatpush2.bf16.msra.mxu0 0
    %253 = vmatprep.subr.bf16.mxu0 0
    %254 = vmatpush2.bf16.msra.mxu0 0
    %255 = vmatprep.mubr.bf16.mxu0 0
    %256 = vmatmul.mubr.bf16.gmra.mxu0 %v221
    %v257 = vpop.f32.mrf.mxu0
    %v258 = vadd.f32 0.0, %v257
    %v259 = vpop.f32.mrf.mxu0
    %v260 = vadd.f32 0.0, %v259
    %v261 = vpop.f32.mrf.mxu0
    %v262 = vadd.f32 0.0, %v261
    %v263 = vpop.f32.mrf.mxu0
    %v264 = vadd.f32 0.0, %v263
    %265 = vdwg.mxu0
    %266 = vmatprep.subr.bf16.mxu0 0
    %267 = vmatpush1.bf16.msra.mxu0 0
    %268 = vmatprep.subr.bf16.mxu0 0
    %269 = vmatpush1.bf16.msra.mxu0 0
    %270 = vmatprep.subr.bf16.mxu0 0
    %271 = vmatpush1.bf16.msra.mxu0 0
    %272 = vmatprep.subr.bf16.mxu0 0
    %273 = vmatpush1.bf16.msra.mxu0 0
    %274 = vmatprep.subr.bf16.mxu0 0
    %275 = vmatpush1.bf16.msra.mxu0 0
    %276 = vmatprep.subr.bf16.mxu0 0
    %277 = vmatpush1.bf16.msra.mxu0 0
    %278 = vmatprep.subr.bf16.mxu0 %v195
    %279 = vmatpush1.bf16.msra.mxu0 %v194
    %280 = vmatprep.subr.bf16.mxu0 %v186
    %281 = vmatpush1.bf16.msra.mxu0 %v185
    %282 = vmatprep.subr.bf16.mxu0 0
    %283 = vmatpush2.bf16.msra.mxu0 0
    %284 = vmatprep.subr.bf16.mxu0 0
    %285 = vmatpush2.bf16.msra.mxu0 0
    %286 = vmatprep.subr.bf16.mxu0 0
    %287 = vmatpush2.bf16.msra.mxu0 0
    %288 = vmatprep.subr.bf16.mxu0 0
    %289 = vmatpush2.bf16.msra.mxu0 0
    %290 = vmatprep.subr.bf16.mxu0 0
    %291 = vmatpush2.bf16.msra.mxu0 0
    %292 = vmatprep.subr.bf16.mxu0 0
    %293 = vmatpush2.bf16.msra.mxu0 0
    %294 = vmatprep.subr.bf16.mxu0 0
    %295 = vmatpush2.bf16.msra.mxu0 0
    %296 = vmatprep.subr.bf16.mxu0 0
    %297 = vmatpush2.bf16.msra.mxu0 0
    %298 = vmatprep.mubr.bf16.mxu0 0
    %299 = vmatmul.mubr.bf16.gmra.mxu0 %v221
    %v300 = vpop.f32.mrf.mxu0
    %v301 = vadd.f32 0.0, %v300
    %v302 = vpop.f32.mrf.mxu0
    %v303 = vadd.f32 0.0, %v302
    %v304 = vpop.f32.mrf.mxu0
    %v305 = vadd.f32 0.0, %v304
    %v306 = vpop.f32.mrf.mxu0
    %v307 = vadd.f32 0.0, %v306
    %308 = vdwg.mxu0
    %309 = vmatprep.subr.bf16.mxu0 0
    %310 = vmatpush1.bf16.msra.mxu0 0
    %311 = vmatprep.subr.bf16.mxu0 0
    %312 = vmatpush1.bf16.msra.mxu0 0
    %313 = vmatprep.subr.bf16.mxu0 0
    %314 = vmatpush1.bf16.msra.mxu0 0
    %315 = vmatprep.subr.bf16.mxu0 0
    %316 = vmatpush1.bf16.msra.mxu0 0
    %317 = vmatprep.subr.bf16.mxu0 0
    %318 = vmatpush1.bf16.msra.mxu0 0
    %319 = vmatprep.subr.bf16.mxu0 0
    %320 = vmatpush1.bf16.msra.mxu0 0
    %321 = vmatprep.subr.bf16.mxu0 %v197
    %322 = vmatpush1.bf16.msra.mxu0 %v196
    %323 = vmatprep.subr.bf16.mxu0 %v188
    %324 = vmatpush1.bf16.msra.mxu0 %v187
    %325 = vmatprep.subr.bf16.mxu0 0
    %326 = vmatpush2.bf16.msra.mxu0 0
    %327 = vmatprep.subr.bf16.mxu0 0
    %328 = vmatpush2.bf16.msra.mxu0 0
    %329 = vmatprep.subr.bf16.mxu0 0
    %330 = vmatpush2.bf16.msra.mxu0 0
    %331 = vmatprep.subr.bf16.mxu0 0
    %332 = vmatpush2.bf16.msra.mxu0 0
    %333 = vmatprep.subr.bf16.mxu0 0
    %334 = vmatpush2.bf16.msra.mxu0 0
    %335 = vmatprep.subr.bf16.mxu0 0
    %336 = vmatpush2.bf16.msra.mxu0 0
    %337 = vmatprep.subr.bf16.mxu0 0
    %338 = vmatpush2.bf16.msra.mxu0 0
    %339 = vmatprep.subr.bf16.mxu0 0
    %340 = vmatpush2.bf16.msra.mxu0 0
    %341 = vmatprep.mubr.bf16.mxu0 0
    %342 = vmatmul.mubr.bf16.gmra.mxu0 %v221
    %v343 = vpop.f32.mrf.mxu0
    %v344 = vadd.f32 0.0, %v343
    %v345 = vpop.f32.mrf.mxu0
    %v346 = vadd.f32 0.0, %v345
    %v347 = vpop.f32.mrf.mxu0
    %v348 = vadd.f32 0.0, %v347
    %v349 = vpop.f32.mrf.mxu0
    %v350 = vadd.f32 0.0, %v349
    %351 = vdwg.mxu0
    %352 = vmatprep.subr.bf16.mxu0 0
    %353 = vmatpush1.bf16.msra.mxu0 0
    %354 = vmatprep.subr.bf16.mxu0 0
    %355 = vmatpush1.bf16.msra.mxu0 0
    %356 = vmatprep.subr.bf16.mxu0 0
    %357 = vmatpush1.bf16.msra.mxu0 0
    %358 = vmatprep.subr.bf16.mxu0 0
    %359 = vmatpush1.bf16.msra.mxu0 0
    %360 = vmatprep.subr.bf16.mxu0 0
    %361 = vmatpush1.bf16.msra.mxu0 0
    %362 = vmatprep.subr.bf16.mxu0 0
    %363 = vmatpush1.bf16.msra.mxu0 0
    %364 = vmatprep.subr.bf16.mxu0 %v199
    %365 = vmatpush1.bf16.msra.mxu0 %v198
    %366 = vmatprep.subr.bf16.mxu0 %v190
    %367 = vmatpush1.bf16.msra.mxu0 %v189
    %368 = vmatprep.subr.bf16.mxu0 0
    %369 = vmatpush2.bf16.msra.mxu0 0
    %370 = vmatprep.subr.bf16.mxu0 0
    %371 = vmatpush2.bf16.msra.mxu0 0
    %372 = vmatprep.subr.bf16.mxu0 0
    %373 = vmatpush2.bf16.msra.mxu0 0
    %374 = vmatprep.subr.bf16.mxu0 0
    %375 = vmatpush2.bf16.msra.mxu0 0
    %376 = vmatprep.subr.bf16.mxu0 0
    %377 = vmatpush2.bf16.msra.mxu0 0
    %378 = vmatprep.subr.bf16.mxu0 0
    %379 = vmatpush2.bf16.msra.mxu0 0
    %380 = vmatprep.subr.bf16.mxu0 0
    %381 = vmatpush2.bf16.msra.mxu0 0
    %382 = vmatprep.subr.bf16.mxu0 0
    %383 = vmatpush2.bf16.msra.mxu0 0
    %384 = vmatprep.mubr.bf16.mxu0 0
    %385 = vmatmul.mubr.bf16.gmra.mxu0 %v221
    %v386 = vpop.f32.mrf.mxu0
    %v387 = vadd.f32 0.0, %v386
    %v388 = vpop.f32.mrf.mxu0
    %v389 = vadd.f32 0.0, %v388
    %v390 = vpop.f32.mrf.mxu0
    %v391 = vadd.f32 0.0, %v390
    %v392 = vpop.f32.mrf.mxu0
    %v393 = vadd.f32 0.0, %v392
    %394 = vdwg.mxu0
    %395 = vmatprep.subr.bf16.mxu0 0
    %396 = vmatpush1.bf16.msra.mxu0 0
    %397 = vmatprep.subr.bf16.mxu0 0
    %398 = vmatpush1.bf16.msra.mxu0 0
    %399 = vmatprep.subr.bf16.mxu0 0
    %400 = vmatpush1.bf16.msra.mxu0 0
    %401 = vmatprep.subr.bf16.mxu0 0
    %402 = vmatpush1.bf16.msra.mxu0 0
    %403 = vmatprep.subr.bf16.mxu0 0
    %404 = vmatpush1.bf16.msra.mxu0 0
    %405 = vmatprep.subr.bf16.mxu0 0
    %406 = vmatpush1.bf16.msra.mxu0 0
    %407 = vmatprep.subr.bf16.mxu0 0
    %408 = vmatpush1.bf16.msra.mxu0 %v200
    %409 = vmatprep.subr.bf16.mxu0 0
    %410 = vmatpush1.bf16.msra.mxu0 %v191
    %411 = vmatprep.subr.bf16.mxu0 0
    %412 = vmatpush2.bf16.msra.mxu0 0
    %413 = vmatprep.subr.bf16.mxu0 0
    %414 = vmatpush2.bf16.msra.mxu0 0
    %415 = vmatprep.subr.bf16.mxu0 0
    %416 = vmatpush2.bf16.msra.mxu0 0
    %417 = vmatprep.subr.bf16.mxu0 0
    %418 = vmatpush2.bf16.msra.mxu0 0
    %419 = vmatprep.subr.bf16.mxu0 0
    %420 = vmatpush2.bf16.msra.mxu0 0
    %421 = vmatprep.subr.bf16.mxu0 0
    %422 = vmatpush2.bf16.msra.mxu0 0
    %423 = vmatprep.subr.bf16.mxu0 0
    %424 = vmatpush2.bf16.msra.mxu0 0
    %425 = vmatprep.subr.bf16.mxu0 0
    %426 = vmatpush2.bf16.msra.mxu0 0
    %427 = vmatprep.mubr.bf16.mxu0 0
    %428 = vmatmul.mubr.bf16.gmra.mxu0 %v221
    %v429 = vpop.f32.mrf.mxu0
    %v430 = vadd.f32 0.0, %v429
    %v431 = vpop.f32.mrf.mxu0
    %v432 = vpop.f32.mrf.mxu0
    %v433 = vadd.f32 0.0, %v432
    %v434 = vpop.f32.mrf.mxu0
    %435 = vdwg.mxu0
    %v436 = vpack.c.bf16 %v104, %v101
    %v437 = vld [vmem:[%s5] sm:$0xf]
    %v438 = vld [vmem:[%s5 + $0x4] sm:$0xf]
    %v439 = vld [vmem:[%s5 + $0x8] sm:$0xf]
    %v440 = vld [vmem:[%s5 + $0xc] sm:$0xf]
    %v445 = vunpack.c.l.b16 %v437
    %v446 = vunpack.c.l.b16 %v438
    %v447 = vunpack.c.l.b16 %v439
    %v448 = vunpack.c.l.b16 %v440
    %v449 = vpack.c.b16 %v446, %v445
    %v450 = vpack.c.b16 %v448, %v447
    %v454 = vsel %vm219, %v436, 0
    %456 = vmatprep.subr.bf16.mxu0 0
    %457 = vmatpush1.bf16.msra.mxu0 0
    %458 = vmatprep.subr.bf16.mxu0 0
    %459 = vmatpush1.bf16.msra.mxu0 0
    %460 = vmatprep.subr.bf16.mxu0 0
    %461 = vmatpush1.bf16.msra.mxu0 0
    %462 = vmatprep.subr.bf16.mxu0 0
    %463 = vmatpush1.bf16.msra.mxu0 0
    %464 = vmatprep.subr.bf16.mxu0 0
    %465 = vmatpush1.bf16.msra.mxu0 0
    %466 = vmatprep.subr.bf16.mxu0 0
    %467 = vmatpush1.bf16.msra.mxu0 0
    %468 = vmatprep.subr.bf16.mxu0 0
    %469 = vmatpush1.bf16.msra.mxu0 %v450
    %470 = vmatprep.subr.bf16.mxu0 0
    %471 = vmatpush1.bf16.msra.mxu0 %v449
    %472 = vmatprep.subr.bf16.mxu0 0
    %473 = vmatpush2.bf16.msra.mxu0 0
    %474 = vmatprep.subr.bf16.mxu0 0
    %475 = vmatpush2.bf16.msra.mxu0 0
    %476 = vmatprep.subr.bf16.mxu0 0
    %477 = vmatpush2.bf16.msra.mxu0 0
    %478 = vmatprep.subr.bf16.mxu0 0
    %479 = vmatpush2.bf16.msra.mxu0 0
    %480 = vmatprep.subr.bf16.mxu0 0
    %481 = vmatpush2.bf16.msra.mxu0 0
    %482 = vmatprep.subr.bf16.mxu0 0
    %483 = vmatpush2.bf16.msra.mxu0 0
    %484 = vmatprep.subr.bf16.mxu0 0
    %485 = vmatpush2.bf16.msra.mxu0 0
    %486 = vmatprep.subr.bf16.mxu0 0
    %487 = vmatpush2.bf16.msra.mxu0 0
    %488 = vmatprep.mubr.bf16.mxu0 0
    %489 = vmatmul.mubr.bf16.gmra.mxu0 %v454
    %v490 = vpop.f32.mrf.mxu0
    %v491 = vadd.f32 0.0, %v490
    %v492 = vpop.f32.mrf.mxu0
    %v493 = vpop.f32.mrf.mxu0
    %v494 = vadd.f32 0.0, %v493
    %v495 = vpop.f32.mrf.mxu0
    %496 = vdwg.mxu0
    %v497 = vadd.f32 %v258, %v491
    %v498 = vadd.f32 %v262, %v494
    %v499 = vld [vmem:[%s6] sm:$0x1]
    %v501 = vlaneseq
    %v502 = vshrl.u32 %v501, 7
    %v503 = vsub.s32 0, %v502
    %v504 = vrot.slane %v499, %v503
    %v506 = vadd.f32 %v497, %v504
    %v507 = vadd.f32 %v498, %v504
    %v508 = vsub.f32 0.0, %v506
    %v509 = vsub.f32 0.0, %v507
    %v510 = vmul.f32 %v508, 1.442695
    %v511 = vpow.pop %v510
    %v512 = vmul.f32 %v509, 1.442695
    %v513 = vpow.pop %v512
    %v514 = vadd.f32 %v511, 1.0
    %v515 = vadd.f32 %v513, 1.0
    %v516 = vrcp.pop %v514
    %v517 = vrcp.pop %v515
    %v518 = vsub.f32 %v101, %v52
    %v519 = vsub.f32 %v104, %v53
    %v520 = vmul.f32 %v516, %v518
    %v521 = vmul.f32 %v517, %v519
    %v522 = vadd.f32 %v52, %v520
    %v523 = vadd.f32 %v53, %v521
    %v524 = vpack.c.bf16 %v523, %v522
    %v525 = vld [vmem:[%s7] sm:$0xff]
    %v526 = vld [vmem:[%s7 + $0x8] sm:$0xff]
    %v527 = vld [vmem:[%s7 + $0x10] sm:$0xff]
    %v528 = vld [vmem:[%s7 + $0x18] sm:$0xff]
    %v529 = vld [vmem:[%s7 + $0x20] sm:$0xff]
    %v530 = vld [vmem:[%s7 + $0x28] sm:$0xff]
    %v531 = vld [vmem:[%s7 + $0x30] sm:$0xff]
    %v532 = vld [vmem:[%s7 + $0x38] sm:$0xff]
    %v541 = vunpack.c.l.b16 %v525
    %v542 = vunpack.c.h.b16 %v525
    %v543 = vunpack.c.l.b16 %v526
    %v544 = vunpack.c.h.b16 %v526
    %v545 = vunpack.c.l.b16 %v527
    %v546 = vunpack.c.h.b16 %v527
    %v547 = vunpack.c.l.b16 %v528
    %v548 = vunpack.c.h.b16 %v528
    %v549 = vunpack.c.l.b16 %v529
    %v550 = vunpack.c.h.b16 %v529
    %v551 = vunpack.c.l.b16 %v530
    %v552 = vunpack.c.h.b16 %v530
    %v553 = vunpack.c.l.b16 %v531
    %v554 = vunpack.c.h.b16 %v531
    %v555 = vunpack.c.l.b16 %v532
    %v556 = vunpack.c.h.b16 %v532
    %v557 = vpack.c.b16 %v545, %v541
    %v558 = vpack.c.b16 %v546, %v542
    %v559 = vpack.c.b16 %v547, %v543
    %v560 = vpack.c.b16 %v548, %v544
    %v561 = vpack.c.b16 %v553, %v549
    %v562 = vpack.c.b16 %v554, %v550
    %v563 = vpack.c.b16 %v555, %v551
    %v564 = vpack.c.b16 %v556, %v552
    %v574 = vsel %vm219, %v524, 0
    %576 = vmatprep.subr.bf16.mxu0 0
    %577 = vmatpush1.bf16.msra.mxu0 0
    %578 = vmatprep.subr.bf16.mxu0 0
    %579 = vmatpush1.bf16.msra.mxu0 0
    %580 = vmatprep.subr.bf16.mxu0 0
    %581 = vmatpush1.bf16.msra.mxu0 0
    %582 = vmatprep.subr.bf16.mxu0 0
    %583 = vmatpush1.bf16.msra.mxu0 0
    %584 = vmatprep.subr.bf16.mxu0 0
    %585 = vmatpush1.bf16.msra.mxu0 0
    %586 = vmatprep.subr.bf16.mxu0 0
    %587 = vmatpush1.bf16.msra.mxu0 0
    %588 = vmatprep.subr.bf16.mxu0 %v562
    %589 = vmatpush1.bf16.msra.mxu0 %v561
    %590 = vmatprep.subr.bf16.mxu0 %v558
    %591 = vmatpush1.bf16.msra.mxu0 %v557
    %592 = vmatprep.subr.bf16.mxu0 0
    %593 = vmatpush2.bf16.msra.mxu0 0
    %594 = vmatprep.subr.bf16.mxu0 0
    %595 = vmatpush2.bf16.msra.mxu0 0
    %596 = vmatprep.subr.bf16.mxu0 0
    %597 = vmatpush2.bf16.msra.mxu0 0
    %598 = vmatprep.subr.bf16.mxu0 0
    %599 = vmatpush2.bf16.msra.mxu0 0
    %600 = vmatprep.subr.bf16.mxu0 0
    %601 = vmatpush2.bf16.msra.mxu0 0
    %602 = vmatprep.subr.bf16.mxu0 0
    %603 = vmatpush2.bf16.msra.mxu0 0
    %604 = vmatprep.subr.bf16.mxu0 0
    %605 = vmatpush2.bf16.msra.mxu0 0
    %606 = vmatprep.subr.bf16.mxu0 0
    %607 = vmatpush2.bf16.msra.mxu0 0
    %608 = vmatprep.mubr.bf16.mxu0 0
    %609 = vmatmul.mubr.bf16.gmra.mxu0 %v574
    %v610 = vpop.f32.mrf.mxu0
    %v611 = vadd.f32 0.0, %v610
    %v612 = vpop.f32.mrf.mxu0
    %v613 = vadd.f32 0.0, %v612
    %v614 = vpop.f32.mrf.mxu0
    %v615 = vadd.f32 0.0, %v614
    %v616 = vpop.f32.mrf.mxu0
    %v617 = vadd.f32 0.0, %v616
    %618 = vdwg.mxu0
    %619 = vmatprep.subr.bf16.mxu0 0
    %620 = vmatpush1.bf16.msra.mxu0 0
    %621 = vmatprep.subr.bf16.mxu0 0
    %622 = vmatpush1.bf16.msra.mxu0 0
    %623 = vmatprep.subr.bf16.mxu0 0
    %624 = vmatpush1.bf16.msra.mxu0 0
    %625 = vmatprep.subr.bf16.mxu0 0
    %626 = vmatpush1.bf16.msra.mxu0 0
    %627 = vmatprep.subr.bf16.mxu0 0
    %628 = vmatpush1.bf16.msra.mxu0 0
    %629 = vmatprep.subr.bf16.mxu0 0
    %630 = vmatpush1.bf16.msra.mxu0 0
    %631 = vmatprep.subr.bf16.mxu0 %v564
    %632 = vmatpush1.bf16.msra.mxu0 %v563
    %633 = vmatprep.subr.bf16.mxu0 %v560
    %634 = vmatpush1.bf16.msra.mxu0 %v559
    %635 = vmatprep.subr.bf16.mxu0 0
    %636 = vmatpush2.bf16.msra.mxu0 0
    %637 = vmatprep.subr.bf16.mxu0 0
    %638 = vmatpush2.bf16.msra.mxu0 0
    %639 = vmatprep.subr.bf16.mxu0 0
    %640 = vmatpush2.bf16.msra.mxu0 0
    %641 = vmatprep.subr.bf16.mxu0 0
    %642 = vmatpush2.bf16.msra.mxu0 0
    %643 = vmatprep.subr.bf16.mxu0 0
    %644 = vmatpush2.bf16.msra.mxu0 0
    %645 = vmatprep.subr.bf16.mxu0 0
    %646 = vmatpush2.bf16.msra.mxu0 0
    %647 = vmatprep.subr.bf16.mxu0 0
    %648 = vmatpush2.bf16.msra.mxu0 0
    %649 = vmatprep.subr.bf16.mxu0 0
    %650 = vmatpush2.bf16.msra.mxu0 0
    %651 = vmatprep.mubr.bf16.mxu0 0
    %652 = vmatmul.mubr.bf16.gmra.mxu0 %v574
    %v653 = vpop.f32.mrf.mxu0
    %v654 = vadd.f32 0.0, %v653
    %v655 = vpop.f32.mrf.mxu0
    %v656 = vadd.f32 0.0, %v655
    %v657 = vpop.f32.mrf.mxu0
    %v658 = vadd.f32 0.0, %v657
    %v659 = vpop.f32.mrf.mxu0
    %v660 = vadd.f32 0.0, %v659
    %661 = vdwg.mxu0
    %v662 = vld [vmem:[%s1] sm:$0xff]
    %vm663 = vcmp.gt.f32.partialorder %v662, 0.5
    %v664 = vld [vmem:[%s2] sm:$0xff]
    %v665 = vld [vmem:[%s2 + $0x8] sm:$0xff]
    %vm666 = vcmp.gt.f32.partialorder %v664, 0.5
    %v667 = vsel %vm666, 1, 0
    %668 = vset.pattern.permute.xlu0 0
    %669 = vperm.xlu0 %668, %v667
    %v670 = vpop.permute.xlu0 %669
    %vm671 = vcmp.eq.s32.totalorder %v670, 1
    %vm672 = vmor %vm663, %vm671
    %v673 = vpack.c.bf16 %v611, %v611
    %v674 = vpack.c.bf16 %v260, %v260
    %v675 = vpack.c.bf16 %v346, %v346
    %676 = vmatprep.subr.bf16.mxu0 0
    %677 = vmatpush1.bf16.xpose.msra.mxu0 0
    %678 = vmatprep.subr.bf16.mxu0 0
    %679 = vmatpush1.bf16.xpose.msra.mxu0 0
    %680 = vmatprep.subr.bf16.mxu0 0
    %681 = vmatpush1.bf16.xpose.msra.mxu0 0
    %682 = vmatprep.subr.bf16.mxu0 0
    %683 = vmatpush1.bf16.xpose.msra.mxu0 0
    %684 = vmatprep.subr.bf16.mxu0 0
    %685 = vmatpush1.bf16.xpose.msra.mxu0 0
    %686 = vmatprep.subr.bf16.mxu0 0
    %687 = vmatpush1.bf16.xpose.msra.mxu0 0
    %688 = vmatprep.subr.bf16.mxu0 0
    %689 = vmatpush1.bf16.xpose.msra.mxu0 0
    %690 = vmatprep.subr.bf16.mxu0 0
    %691 = vmatpush1.bf16.xpose.msra.mxu0 %v674
    %692 = vmatprep.subr.bf16.mxu0 0
    %693 = vmatpush2.bf16.xpose.msra.mxu0 0
    %694 = vmatprep.subr.bf16.mxu0 0
    %695 = vmatpush2.bf16.xpose.msra.mxu0 0
    %696 = vmatprep.subr.bf16.mxu0 0
    %697 = vmatpush2.bf16.xpose.msra.mxu0 0
    %698 = vmatprep.subr.bf16.mxu0 0
    %699 = vmatpush2.bf16.xpose.msra.mxu0 0
    %700 = vmatprep.subr.bf16.mxu0 0
    %701 = vmatpush2.bf16.xpose.msra.mxu0 0
    %702 = vmatprep.subr.bf16.mxu0 0
    %703 = vmatpush2.bf16.xpose.msra.mxu0 0
    %704 = vmatprep.subr.bf16.mxu0 0
    %705 = vmatpush2.bf16.xpose.msra.mxu0 0
    %706 = vmatprep.subr.bf16.mxu0 0
    %707 = vmatpush2.bf16.xpose.msra.mxu0 0
    %708 = vmatprep.mubr.bf16.mxu0 0
    %709 = vmatmul.mubr.bf16.gmra.mxu0 %v673
    %v710 = vpop.f32.mrf.mxu0
    %v711 = vadd.f32 0.0, %v710
    %v712 = vpop.f32.mrf.mxu0
    %v713 = vpop.f32.mrf.mxu0
    %v714 = vpop.f32.mrf.mxu0
    %715 = vdwg.mxu0
    %v716 = vsel %vm672, -4.2949673e+09, %v711
    %vm717 = vcmask 64512
    %v718 = vsel %vm717, %v716, -inf
    %719 = vmax.xlane.f32.xlu0 %v718
    %v720 = vpop.xlane.xlu0 %719
    %v721 = vsub.f32 %v716, %v720
    %v722 = vmul.f32 %v721, 1.442695
    %v723 = vpow.pop %v722
    %v724 = vsel %vm717, %v723, 0.0
    %725 = vadd.xlane.f32.xlu0 %v724
    %v726 = vpop.xlane.xlu0 %725
    %v727 = vrcp.pop %v726
    %v728 = vmul.f32 %v723, %v727
    %v729 = vpack.c.bf16 %v728, %v728
    %v731 = vsel %vm717, %v729, 0
    %vm733 = vcmask 1043456
    %v735 = vsel %vm733, %v675, 0
    %737 = vmatprep.subr.bf16.mxu0 0
    %738 = vmatpush1.bf16.msra.mxu0 0
    %739 = vmatprep.subr.bf16.mxu0 0
    %740 = vmatpush1.bf16.msra.mxu0 0
    %741 = vmatprep.subr.bf16.mxu0 0
    %742 = vmatpush1.bf16.msra.mxu0 0
    %743 = vmatprep.subr.bf16.mxu0 0
    %744 = vmatpush1.bf16.msra.mxu0 0
    %745 = vmatprep.subr.bf16.mxu0 0
    %746 = vmatpush1.bf16.msra.mxu0 0
    %747 = vmatprep.subr.bf16.mxu0 0
    %748 = vmatpush1.bf16.msra.mxu0 0
    %749 = vmatprep.subr.bf16.mxu0 0
    %750 = vmatpush1.bf16.msra.mxu0 0
    %751 = vmatprep.subr.bf16.mxu0 0
    %752 = vmatpush1.bf16.msra.mxu0 %v735
    %753 = vmatprep.subr.bf16.mxu0 0
    %754 = vmatpush2.bf16.msra.mxu0 0
    %755 = vmatprep.subr.bf16.mxu0 0
    %756 = vmatpush2.bf16.msra.mxu0 0
    %757 = vmatprep.subr.bf16.mxu0 0
    %758 = vmatpush2.bf16.msra.mxu0 0
    %759 = vmatprep.subr.bf16.mxu0 0
    %760 = vmatpush2.bf16.msra.mxu0 0
    %761 = vmatprep.subr.bf16.mxu0 0
    %762 = vmatpush2.bf16.msra.mxu0 0
    %763 = vmatprep.subr.bf16.mxu0 0
    %764 = vmatpush2.bf16.msra.mxu0 0
    %765 = vmatprep.subr.bf16.mxu0 0
    %766 = vmatpush2.bf16.msra.mxu0 0
    %767 = vmatprep.subr.bf16.mxu0 0
    %768 = vmatpush2.bf16.msra.mxu0 0
    %769 = vmatprep.mubr.bf16.mxu0 0
    %770 = vmatmul.mubr.bf16.gmra.mxu0 %v731
    %v771 = vpop.f32.mrf.mxu0
    %v772 = vadd.f32 0.0, %v771
    %v773 = vpop.f32.mrf.mxu0
    %v774 = vpop.f32.mrf.mxu0
    %v775 = vpop.f32.mrf.mxu0
    %776 = vdwg.mxu0
    %777 = vst [vmem:[#allocation2] sm:$0xff] %v772
    %v778 = vpack.c.bf16 %v613, %v613
    %v779 = vpack.c.bf16 %v301, %v301
    %v780 = vpack.c.bf16 %v387, %v387
    %781 = vmatprep.subr.bf16.mxu0 0
    %782 = vmatpush1.bf16.xpose.msra.mxu0 0
    %783 = vmatprep.subr.bf16.mxu0 0
    %784 = vmatpush1.bf16.xpose.msra.mxu0 0
    %785 = vmatprep.subr.bf16.mxu0 0
    %786 = vmatpush1.bf16.xpose.msra.mxu0 0
    %787 = vmatprep.subr.bf16.mxu0 0
    %788 = vmatpush1.bf16.xpose.msra.mxu0 0
    %789 = vmatprep.subr.bf16.mxu0 0
    %790 = vmatpush1.bf16.xpose.msra.mxu0 0
    %791 = vmatprep.subr.bf16.mxu0 0
    %792 = vmatpush1.bf16.xpose.msra.mxu0 0
    %793 = vmatprep.subr.bf16.mxu0 0
    %794 = vmatpush1.bf16.xpose.msra.mxu0 0
    %795 = vmatprep.subr.bf16.mxu0 0
    %796 = vmatpush1.bf16.xpose.msra.mxu0 %v779
    %797 = vmatprep.subr.bf16.mxu0 0
    %798 = vmatpush2.bf16.xpose.msra.mxu0 0
    %799 = vmatprep.subr.bf16.mxu0 0
    %800 = vmatpush2.bf16.xpose.msra.mxu0 0
    %801 = vmatprep.subr.bf16.mxu0 0
    %802 = vmatpush2.bf16.xpose.msra.mxu0 0
    %803 = vmatprep.subr.bf16.mxu0 0
    %804 = vmatpush2.bf16.xpose.msra.mxu0 0
    %805 = vmatprep.subr.bf16.mxu0 0
    %806 = vmatpush2.bf16.xpose.msra.mxu0 0
    %807 = vmatprep.subr.bf16.mxu0 0
    %808 = vmatpush2.bf16.xpose.msra.mxu0 0
    %809 = vmatprep.subr.bf16.mxu0 0
    %810 = vmatpush2.bf16.xpose.msra.mxu0 0
    %811 = vmatprep.subr.bf16.mxu0 0
    %812 = vmatpush2.bf16.xpose.msra.mxu0 0
    %813 = vmatprep.mubr.bf16.mxu0 0
    %814 = vmatmul.mubr.bf16.gmra.mxu0 %v778
    %v815 = vpop.f32.mrf.mxu0
    %v816 = vadd.f32 0.0, %v815
    %v817 = vpop.f32.mrf.mxu0
    %v818 = vpop.f32.mrf.mxu0
    %v819 = vpop.f32.mrf.mxu0
    %820 = vdwg.mxu0
    %v821 = vsel %vm672, -4.2949673e+09, %v816
    %v822 = vsel %vm717, %v821, -inf
    %823 = vmax.xlane.f32.xlu0 %v822
    %v824 = vpop.xlane.xlu0 %823
    %v825 = vsub.f32 %v821, %v824
    %v826 = vmul.f32 %v825, 1.442695
    %v827 = vpow.pop %v826
    %v828 = vsel %vm717, %v827, 0.0
    %829 = vadd.xlane.f32.xlu0 %v828
    %v830 = vpop.xlane.xlu0 %829
    %v831 = vrcp.pop %v830
    %v832 = vmul.f32 %v827, %v831
    %v833 = vpack.c.bf16 %v832, %v832
    %v835 = vsel %vm717, %v833, 0
    %v838 = vsel %vm733, %v780, 0
    %840 = vmatprep.subr.bf16.mxu0 0
    %841 = vmatpush1.bf16.msra.mxu0 0
    %842 = vmatprep.subr.bf16.mxu0 0
    %843 = vmatpush1.bf16.msra.mxu0 0
    %844 = vmatprep.subr.bf16.mxu0 0
    %845 = vmatpush1.bf16.msra.mxu0 0
    %846 = vmatprep.subr.bf16.mxu0 0
    %847 = vmatpush1.bf16.msra.mxu0 0
    %848 = vmatprep.subr.bf16.mxu0 0
    %849 = vmatpush1.bf16.msra.mxu0 0
    %850 = vmatprep.subr.bf16.mxu0 0
    %851 = vmatpush1.bf16.msra.mxu0 0
    %852 = vmatprep.subr.bf16.mxu0 0
    %853 = vmatpush1.bf16.msra.mxu0 0
    %854 = vmatprep.subr.bf16.mxu0 0
    %855 = vmatpush1.bf16.msra.mxu0 %v838
    %856 = vmatprep.subr.bf16.mxu0 0
    %857 = vmatpush2.bf16.msra.mxu0 0
    %858 = vmatprep.subr.bf16.mxu0 0
    %859 = vmatpush2.bf16.msra.mxu0 0
    %860 = vmatprep.subr.bf16.mxu0 0
    %861 = vmatpush2.bf16.msra.mxu0 0
    %862 = vmatprep.subr.bf16.mxu0 0
    %863 = vmatpush2.bf16.msra.mxu0 0
    %864 = vmatprep.subr.bf16.mxu0 0
    %865 = vmatpush2.bf16.msra.mxu0 0
    %866 = vmatprep.subr.bf16.mxu0 0
    %867 = vmatpush2.bf16.msra.mxu0 0
    %868 = vmatprep.subr.bf16.mxu0 0
    %869 = vmatpush2.bf16.msra.mxu0 0
    %870 = vmatprep.subr.bf16.mxu0 0
    %871 = vmatpush2.bf16.msra.mxu0 0
    %872 = vmatprep.mubr.bf16.mxu0 0
    %873 = vmatmul.mubr.bf16.gmra.mxu0 %v835
    %v874 = vpop.f32.mrf.mxu0
    %v875 = vadd.f32 0.0, %v874
    %v876 = vpop.f32.mrf.mxu0
    %v877 = vpop.f32.mrf.mxu0
    %v878 = vpop.f32.mrf.mxu0
    %879 = vdwg.mxu0
    %880 = vst [vmem:[#allocation2 + $0x8] sm:$0xff] %v875
    %v881 = vpack.c.bf16 %v654, %v654
    %v882 = vpack.c.bf16 %v303, %v303
    %v883 = vpack.c.bf16 %v389, %v389
    %884 = vmatprep.subr.bf16.mxu0 0
    %885 = vmatpush1.bf16.xpose.msra.mxu0 0
    %886 = vmatprep.subr.bf16.mxu0 0
    %887 = vmatpush1.bf16.xpose.msra.mxu0 0
    %888 = vmatprep.subr.bf16.mxu0 0
    %889 = vmatpush1.bf16.xpose.msra.mxu0 0
    %890 = vmatprep.subr.bf16.mxu0 0
    %891 = vmatpush1.bf16.xpose.msra.mxu0 0
    %892 = vmatprep.subr.bf16.mxu0 0
    %893 = vmatpush1.bf16.xpose.msra.mxu0 0
    %894 = vmatprep.subr.bf16.mxu0 0
    %895 = vmatpush1.bf16.xpose.msra.mxu0 0
    %896 = vmatprep.subr.bf16.mxu0 0
    %897 = vmatpush1.bf16.xpose.msra.mxu0 0
    %898 = vmatprep.subr.bf16.mxu0 0
    %899 = vmatpush1.bf16.xpose.msra.mxu0 %v882
    %900 = vmatprep.subr.bf16.mxu0 0
    %901 = vmatpush2.bf16.xpose.msra.mxu0 0
    %902 = vmatprep.subr.bf16.mxu0 0
    %903 = vmatpush2.bf16.xpose.msra.mxu0 0
    %904 = vmatprep.subr.bf16.mxu0 0
    %905 = vmatpush2.bf16.xpose.msra.mxu0 0
    %906 = vmatprep.subr.bf16.mxu0 0
    %907 = vmatpush2.bf16.xpose.msra.mxu0 0
    %908 = vmatprep.subr.bf16.mxu0 0
    %909 = vmatpush2.bf16.xpose.msra.mxu0 0
    %910 = vmatprep.subr.bf16.mxu0 0
    %911 = vmatpush2.bf16.xpose.msra.mxu0 0
    %912 = vmatprep.subr.bf16.mxu0 0
    %913 = vmatpush2.bf16.xpose.msra.mxu0 0
    %914 = vmatprep.subr.bf16.mxu0 0
    %915 = vmatpush2.bf16.xpose.msra.mxu0 0
    %916 = vmatprep.mubr.bf16.mxu0 0
    %917 = vmatmul.mubr.bf16.gmra.mxu0 %v881
    %v918 = vpop.f32.mrf.mxu0
    %v919 = vadd.f32 0.0, %v918
    %v920 = vpop.f32.mrf.mxu0
    %v921 = vpop.f32.mrf.mxu0
    %v922 = vpop.f32.mrf.mxu0
    %923 = vdwg.mxu0
    %v924 = vsel %vm672, -4.2949673e+09, %v919
    %v925 = vsel %vm717, %v924, -inf
    %926 = vmax.xlane.f32.xlu0 %v925
    %v927 = vpop.xlane.xlu0 %926
    %v928 = vsub.f32 %v924, %v927
    %v929 = vmul.f32 %v928, 1.442695
    %v930 = vpow.pop %v929
    %v931 = vsel %vm717, %v930, 0.0
    %932 = vadd.xlane.f32.xlu0 %v931
    %v933 = vpop.xlane.xlu0 %932
    %v934 = vrcp.pop %v933
    %v935 = vmul.f32 %v930, %v934
    %v936 = vpack.c.bf16 %v935, %v935
    %v938 = vsel %vm717, %v936, 0
    %v941 = vsel %vm733, %v883, 0
    %943 = vmatprep.subr.bf16.mxu0 0
    %944 = vmatpush1.bf16.msra.mxu0 0
    %945 = vmatprep.subr.bf16.mxu0 0
    %946 = vmatpush1.bf16.msra.mxu0 0
    %947 = vmatprep.subr.bf16.mxu0 0
    %948 = vmatpush1.bf16.msra.mxu0 0
    %949 = vmatprep.subr.bf16.mxu0 0
    %950 = vmatpush1.bf16.msra.mxu0 0
    %951 = vmatprep.subr.bf16.mxu0 0
    %952 = vmatpush1.bf16.msra.mxu0 0
    %953 = vmatprep.subr.bf16.mxu0 0
    %954 = vmatpush1.bf16.msra.mxu0 0
    %955 = vmatprep.subr.bf16.mxu0 0
    %956 = vmatpush1.bf16.msra.mxu0 0
    %957 = vmatprep.subr.bf16.mxu0 0
    %958 = vmatpush1.bf16.msra.mxu0 %v941
    %959 = vmatprep.subr.bf16.mxu0 0
    %960 = vmatpush2.bf16.msra.mxu0 0
    %961 = vmatprep.subr.bf16.mxu0 0
    %962 = vmatpush2.bf16.msra.mxu0 0
    %963 = vmatprep.subr.bf16.mxu0 0
    %964 = vmatpush2.bf16.msra.mxu0 0
    %965 = vmatprep.subr.bf16.mxu0 0
    %966 = vmatpush2.bf16.msra.mxu0 0
    %967 = vmatprep.subr.bf16.mxu0 0
    %968 = vmatpush2.bf16.msra.mxu0 0
    %969 = vmatprep.subr.bf16.mxu0 0
    %970 = vmatpush2.bf16.msra.mxu0 0
    %971 = vmatprep.subr.bf16.mxu0 0
    %972 = vmatpush2.bf16.msra.mxu0 0
    %973 = vmatprep.subr.bf16.mxu0 0
    %974 = vmatpush2.bf16.msra.mxu0 0
    %975 = vmatprep.mubr.bf16.mxu0 0
    %976 = vmatmul.mubr.bf16.gmra.mxu0 %v938
    %v977 = vpop.f32.mrf.mxu0
    %v978 = vadd.f32 0.0, %v977
    %v979 = vpop.f32.mrf.mxu0
    %v980 = vpop.f32.mrf.mxu0
    %v981 = vpop.f32.mrf.mxu0
    %982 = vdwg.mxu0
    %983 = vst [vmem:[#allocation2 + $0x10] sm:$0xff] %v978
    %v984 = vpack.c.bf16 %v656, %v656
    %v985 = vpack.c.bf16 %v344, %v344
    %v986 = vpack.c.bf16 %v430, %v430
    %987 = vmatprep.subr.bf16.mxu0 0
    %988 = vmatpush1.bf16.xpose.msra.mxu0 0
    %989 = vmatprep.subr.bf16.mxu0 0
    %990 = vmatpush1.bf16.xpose.msra.mxu0 0
    %991 = vmatprep.subr.bf16.mxu0 0
    %992 = vmatpush1.bf16.xpose.msra.mxu0 0
    %993 = vmatprep.subr.bf16.mxu0 0
    %994 = vmatpush1.bf16.xpose.msra.mxu0 0
    %995 = vmatprep.subr.bf16.mxu0 0
    %996 = vmatpush1.bf16.xpose.msra.mxu0 0
    %997 = vmatprep.subr.bf16.mxu0 0
    %998 = vmatpush1.bf16.xpose.msra.mxu0 0
    %999 = vmatprep.subr.bf16.mxu0 0
    %1000 = vmatpush1.bf16.xpose.msra.mxu0 0
    %1001 = vmatprep.subr.bf16.mxu0 0
    %1002 = vmatpush1.bf16.xpose.msra.mxu0 %v985
    %1003 = vmatprep.subr.bf16.mxu0 0
    %1004 = vmatpush2.bf16.xpose.msra.mxu0 0
    %1005 = vmatprep.subr.bf16.mxu0 0
    %1006 = vmatpush2.bf16.xpose.msra.mxu0 0
    %1007 = vmatprep.subr.bf16.mxu0 0
    %1008 = vmatpush2.bf16.xpose.msra.mxu0 0
    %1009 = vmatprep.subr.bf16.mxu0 0
    %1010 = vmatpush2.bf16.xpose.msra.mxu0 0
    %1011 = vmatprep.subr.bf16.mxu0 0
    %1012 = vmatpush2.bf16.xpose.msra.mxu0 0
    %1013 = vmatprep.subr.bf16.mxu0 0
    %1014 = vmatpush2.bf16.xpose.msra.mxu0 0
    %1015 = vmatprep.subr.bf16.mxu0 0
    %1016 = vmatpush2.bf16.xpose.msra.mxu0 0
    %1017 = vmatprep.subr.bf16.mxu0 0
    %1018 = vmatpush2.bf16.xpose.msra.mxu0 0
    %1019 = vmatprep.mubr.bf16.mxu0 0
    %1020 = vmatmul.mubr.bf16.gmra.mxu0 %v984
    %v1021 = vpop.f32.mrf.mxu0
    %v1022 = vadd.f32 0.0, %v1021
    %v1023 = vpop.f32.mrf.mxu0
    %v1024 = vpop.f32.mrf.mxu0
    %v1025 = vpop.f32.mrf.mxu0
    %1026 = vdwg.mxu0
    %v1027 = vsel %vm672, -4.2949673e+09, %v1022
    %v1028 = vsel %vm717, %v1027, -inf
    %1029 = vmax.xlane.f32.xlu0 %v1028
    %v1030 = vpop.xlane.xlu0 %1029
    %v1031 = vsub.f32 %v1027, %v1030
    %v1032 = vmul.f32 %v1031, 1.442695
    %v1033 = vpow.pop %v1032
    %v1034 = vsel %vm717, %v1033, 0.0
    %1035 = vadd.xlane.f32.xlu0 %v1034
    %v1036 = vpop.xlane.xlu0 %1035
    %v1037 = vrcp.pop %v1036
    %v1038 = vmul.f32 %v1033, %v1037
    %v1039 = vpack.c.bf16 %v1038, %v1038
    %v1041 = vsel %vm717, %v1039, 0
    %v1044 = vsel %vm733, %v986, 0
    %1046 = vmatprep.subr.bf16.mxu0 0
    %1047 = vmatpush1.bf16.msra.mxu0 0
    %1048 = vmatprep.subr.bf16.mxu0 0
    %1049 = vmatpush1.bf16.msra.mxu0 0
    %1050 = vmatprep.subr.bf16.mxu0 0
    %1051 = vmatpush1.bf16.msra.mxu0 0
    %1052 = vmatprep.subr.bf16.mxu0 0
    %1053 = vmatpush1.bf16.msra.mxu0 0
    %1054 = vmatprep.subr.bf16.mxu0 0
    %1055 = vmatpush1.bf16.msra.mxu0 0
    %1056 = vmatprep.subr.bf16.mxu0 0
    %1057 = vmatpush1.bf16.msra.mxu0 0
    %1058 = vmatprep.subr.bf16.mxu0 0
    %1059 = vmatpush1.bf16.msra.mxu0 0
    %1060 = vmatprep.subr.bf16.mxu0 0
    %1061 = vmatpush1.bf16.msra.mxu0 %v1044
    %1062 = vmatprep.subr.bf16.mxu0 0
    %1063 = vmatpush2.bf16.msra.mxu0 0
    %1064 = vmatprep.subr.bf16.mxu0 0
    %1065 = vmatpush2.bf16.msra.mxu0 0
    %1066 = vmatprep.subr.bf16.mxu0 0
    %1067 = vmatpush2.bf16.msra.mxu0 0
    %1068 = vmatprep.subr.bf16.mxu0 0
    %1069 = vmatpush2.bf16.msra.mxu0 0
    %1070 = vmatprep.subr.bf16.mxu0 0
    %1071 = vmatpush2.bf16.msra.mxu0 0
    %1072 = vmatprep.subr.bf16.mxu0 0
    %1073 = vmatpush2.bf16.msra.mxu0 0
    %1074 = vmatprep.subr.bf16.mxu0 0
    %1075 = vmatpush2.bf16.msra.mxu0 0
    %1076 = vmatprep.subr.bf16.mxu0 0
    %1077 = vmatpush2.bf16.msra.mxu0 0
    %1078 = vmatprep.mubr.bf16.mxu0 0
    %1079 = vmatmul.mubr.bf16.gmra.mxu0 %v1041
    %v1080 = vpop.f32.mrf.mxu0
    %v1081 = vadd.f32 0.0, %v1080
    %v1082 = vpop.f32.mrf.mxu0
    %v1083 = vpop.f32.mrf.mxu0
    %v1084 = vpop.f32.mrf.mxu0
    %1085 = vdwg.mxu0
    %1086 = vst [vmem:[#allocation2 + $0x18] sm:$0xff] %v1081
    %vm1087 = vcmp.gt.f32.partialorder %v665, 0.5
    %v1088 = vsel %vm1087, 1, 0
    %1089 = vset.pattern.permute.xlu0 0
    %1090 = vperm.xlu0 %1089, %v1088
    %v1091 = vpop.permute.xlu0 %1090
    %vm1092 = vcmp.eq.s32.totalorder %v1091, 1
    %vm1093 = vmor %vm663, %vm1092
    %v1094 = vpack.c.bf16 %v615, %v615
    %v1095 = vpack.c.bf16 %v264, %v264
    %v1096 = vpack.c.bf16 %v350, %v350
    %1097 = vmatprep.subr.bf16.mxu0 0
    %1098 = vmatpush1.bf16.xpose.msra.mxu0 0
    %1099 = vmatprep.subr.bf16.mxu0 0
    %1100 = vmatpush1.bf16.xpose.msra.mxu0 0
    %1101 = vmatprep.subr.bf16.mxu0 0
    %1102 = vmatpush1.bf16.xpose.msra.mxu0 0
    %1103 = vmatprep.subr.bf16.mxu0 0
    %1104 = vmatpush1.bf16.xpose.msra.mxu0 0
    %1105 = vmatprep.subr.bf16.mxu0 0
    %1106 = vmatpush1.bf16.xpose.msra.mxu0 0
    %1107 = vmatprep.subr.bf16.mxu0 0
    %1108 = vmatpush1.bf16.xpose.msra.mxu0 0
    %1109 = vmatprep.subr.bf16.mxu0 0
    %1110 = vmatpush1.bf16.xpose.msra.mxu0 0
    %1111 = vmatprep.subr.bf16.mxu0 0
    %1112 = vmatpush1.bf16.xpose.msra.mxu0 %v1095
    %1113 = vmatprep.subr.bf16.mxu0 0
    %1114 = vmatpush2.bf16.xpose.msra.mxu0 0
    %1115 = vmatprep.subr.bf16.mxu0 0
    %1116 = vmatpush2.bf16.xpose.msra.mxu0 0
    %1117 = vmatprep.subr.bf16.mxu0 0
    %1118 = vmatpush2.bf16.xpose.msra.mxu0 0
    %1119 = vmatprep.subr.bf16.mxu0 0
    %1120 = vmatpush2.bf16.xpose.msra.mxu0 0
    %1121 = vmatprep.subr.bf16.mxu0 0
    %1122 = vmatpush2.bf16.xpose.msra.mxu0 0
    %1123 = vmatprep.subr.bf16.mxu0 0
    %1124 = vmatpush2.bf16.xpose.msra.mxu0 0
    %1125 = vmatprep.subr.bf16.mxu0 0
    %1126 = vmatpush2.bf16.xpose.msra.mxu0 0
    %1127 = vmatprep.subr.bf16.mxu0 0
    %1128 = vmatpush2.bf16.xpose.msra.mxu0 0
    %1129 = vmatprep.mubr.bf16.mxu0 0
    %1130 = vmatmul.mubr.bf16.gmra.mxu0 %v1094
    %v1131 = vpop.f32.mrf.mxu0
    %v1132 = vadd.f32 0.0, %v1131
    %v1133 = vpop.f32.mrf.mxu0
    %v1134 = vpop.f32.mrf.mxu0
    %v1135 = vpop.f32.mrf.mxu0
    %1136 = vdwg.mxu0
    %v1137 = vsel %vm1093, -4.2949673e+09, %v1132
    %v1138 = vsel %vm717, %v1137, -inf
    %1139 = vmax.xlane.f32.xlu0 %v1138
    %v1140 = vpop.xlane.xlu0 %1139
    %v1141 = vsub.f32 %v1137, %v1140
    %v1142 = vmul.f32 %v1141, 1.442695
    %v1143 = vpow.pop %v1142
    %v1144 = vsel %vm717, %v1143, 0.0
    %1145 = vadd.xlane.f32.xlu0 %v1144
    %v1146 = vpop.xlane.xlu0 %1145
    %v1147 = vrcp.pop %v1146
    %v1148 = vmul.f32 %v1143, %v1147
    %v1149 = vpack.c.bf16 %v1148, %v1148
    %v1151 = vsel %vm717, %v1149, 0
    %v1154 = vsel %vm733, %v1096, 0
    %1156 = vmatprep.subr.bf16.mxu0 0
    %1157 = vmatpush1.bf16.msra.mxu0 0
    %1158 = vmatprep.subr.bf16.mxu0 0
    %1159 = vmatpush1.bf16.msra.mxu0 0
    %1160 = vmatprep.subr.bf16.mxu0 0
    %1161 = vmatpush1.bf16.msra.mxu0 0
    %1162 = vmatprep.subr.bf16.mxu0 0
    %1163 = vmatpush1.bf16.msra.mxu0 0
    %1164 = vmatprep.subr.bf16.mxu0 0
    %1165 = vmatpush1.bf16.msra.mxu0 0
    %1166 = vmatprep.subr.bf16.mxu0 0
    %1167 = vmatpush1.bf16.msra.mxu0 0
    %1168 = vmatprep.subr.bf16.mxu0 0
    %1169 = vmatpush1.bf16.msra.mxu0 0
    %1170 = vmatprep.subr.bf16.mxu0 0
    %1171 = vmatpush1.bf16.msra.mxu0 %v1154
    %1172 = vmatprep.subr.bf16.mxu0 0
    %1173 = vmatpush2.bf16.msra.mxu0 0
    %1174 = vmatprep.subr.bf16.mxu0 0
    %1175 = vmatpush2.bf16.msra.mxu0 0
    %1176 = vmatprep.subr.bf16.mxu0 0
    %1177 = vmatpush2.bf16.msra.mxu0 0
    %1178 = vmatprep.subr.bf16.mxu0 0
    %1179 = vmatpush2.bf16.msra.mxu0 0
    %1180 = vmatprep.subr.bf16.mxu0 0
    %1181 = vmatpush2.bf16.msra.mxu0 0
    %1182 = vmatprep.subr.bf16.mxu0 0
    %1183 = vmatpush2.bf16.msra.mxu0 0
    %1184 = vmatprep.subr.bf16.mxu0 0
    %1185 = vmatpush2.bf16.msra.mxu0 0
    %1186 = vmatprep.subr.bf16.mxu0 0
    %1187 = vmatpush2.bf16.msra.mxu0 0
    %1188 = vmatprep.mubr.bf16.mxu0 0
    %1189 = vmatmul.mubr.bf16.gmra.mxu0 %v1151
    %v1190 = vpop.f32.mrf.mxu0
    %v1191 = vadd.f32 0.0, %v1190
    %v1192 = vpop.f32.mrf.mxu0
    %v1193 = vpop.f32.mrf.mxu0
    %v1194 = vpop.f32.mrf.mxu0
    %1195 = vdwg.mxu0
    %1196 = vst [vmem:[#allocation2 + $0x20] sm:$0xff] %v1191
    %v1197 = vpack.c.bf16 %v617, %v617
    %v1198 = vpack.c.bf16 %v305, %v305
    %v1199 = vpack.c.bf16 %v391, %v391
    %1200 = vmatprep.subr.bf16.mxu0 0
    %1201 = vmatpush1.bf16.xpose.msra.mxu0 0
    %1202 = vmatprep.subr.bf16.mxu0 0
    %1203 = vmatpush1.bf16.xpose.msra.mxu0 0
    %1204 = vmatprep.subr.bf16.mxu0 0
    %1205 = vmatpush1.bf16.xpose.msra.mxu0 0
    %1206 = vmatprep.subr.bf16.mxu0 0
    %1207 = vmatpush1.bf16.xpose.msra.mxu0 0
    %1208 = vmatprep.subr.bf16.mxu0 0
    %1209 = vmatpush1.bf16.xpose.msra.mxu0 0
    %1210 = vmatprep.subr.bf16.mxu0 0
    %1211 = vmatpush1.bf16.xpose.msra.mxu0 0
    %1212 = vmatprep.subr.bf16.mxu0 0
    %1213 = vmatpush1.bf16.xpose.msra.mxu0 0
    %1214 = vmatprep.subr.bf16.mxu0 0
    %1215 = vmatpush1.bf16.xpose.msra.mxu0 %v1198
    %1216 = vmatprep.subr.bf16.mxu0 0
    %1217 = vmatpush2.bf16.xpose.msra.mxu0 0
    %1218 = vmatprep.subr.bf16.mxu0 0
    %1219 = vmatpush2.bf16.xpose.msra.mxu0 0
    %1220 = vmatprep.subr.bf16.mxu0 0
    %1221 = vmatpush2.bf16.xpose.msra.mxu0 0
    %1222 = vmatprep.subr.bf16.mxu0 0
    %1223 = vmatpush2.bf16.xpose.msra.mxu0 0
    %1224 = vmatprep.subr.bf16.mxu0 0
    %1225 = vmatpush2.bf16.xpose.msra.mxu0 0
    %1226 = vmatprep.subr.bf16.mxu0 0
    %1227 = vmatpush2.bf16.xpose.msra.mxu0 0
    %1228 = vmatprep.subr.bf16.mxu0 0
    %1229 = vmatpush2.bf16.xpose.msra.mxu0 0
    %1230 = vmatprep.subr.bf16.mxu0 0
    %1231 = vmatpush2.bf16.xpose.msra.mxu0 0
    %1232 = vmatprep.mubr.bf16.mxu0 0
    %1233 = vmatmul.mubr.bf16.gmra.mxu0 %v1197
    %v1234 = vpop.f32.mrf.mxu0
    %v1235 = vadd.f32 0.0, %v1234
    %v1236 = vpop.f32.mrf.mxu0
    %v1237 = vpop.f32.mrf.mxu0
    %v1238 = vpop.f32.mrf.mxu0
    %1239 = vdwg.mxu0
    %v1240 = vsel %vm1093, -4.2949673e+09, %v1235
    %v1241 = vsel %vm717, %v1240, -inf
    %1242 = vmax.xlane.f32.xlu0 %v1241
    %v1243 = vpop.xlane.xlu0 %1242
    %v1244 = vsub.f32 %v1240, %v1243
    %v1245 = vmul.f32 %v1244, 1.442695
    %v1246 = vpow.pop %v1245
    %v1247 = vsel %vm717, %v1246, 0.0
    %1248 = vadd.xlane.f32.xlu0 %v1247
    %v1249 = vpop.xlane.xlu0 %1248
    %v1250 = vrcp.pop %v1249
    %v1251 = vmul.f32 %v1246, %v1250
    %v1252 = vpack.c.bf16 %v1251, %v1251
    %v1254 = vsel %vm717, %v1252, 0
    %v1257 = vsel %vm733, %v1199, 0
    %1259 = vmatprep.subr.bf16.mxu0 0
    %1260 = vmatpush1.bf16.msra.mxu0 0
    %1261 = vmatprep.subr.bf16.mxu0 0
    %1262 = vmatpush1.bf16.msra.mxu0 0
    %1263 = vmatprep.subr.bf16.mxu0 0
    %1264 = vmatpush1.bf16.msra.mxu0 0
    %1265 = vmatprep.subr.bf16.mxu0 0
    %1266 = vmatpush1.bf16.msra.mxu0 0
    %1267 = vmatprep.subr.bf16.mxu0 0
    %1268 = vmatpush1.bf16.msra.mxu0 0
    %1269 = vmatprep.subr.bf16.mxu0 0
    %1270 = vmatpush1.bf16.msra.mxu0 0
    %1271 = vmatprep.subr.bf16.mxu0 0
    %1272 = vmatpush1.bf16.msra.mxu0 0
    %1273 = vmatprep.subr.bf16.mxu0 0
    %1274 = vmatpush1.bf16.msra.mxu0 %v1257
    %1275 = vmatprep.subr.bf16.mxu0 0
    %1276 = vmatpush2.bf16.msra.mxu0 0
    %1277 = vmatprep.subr.bf16.mxu0 0
    %1278 = vmatpush2.bf16.msra.mxu0 0
    %1279 = vmatprep.subr.bf16.mxu0 0
    %1280 = vmatpush2.bf16.msra.mxu0 0
    %1281 = vmatprep.subr.bf16.mxu0 0
    %1282 = vmatpush2.bf16.msra.mxu0 0
    %1283 = vmatprep.subr.bf16.mxu0 0
    %1284 = vmatpush2.bf16.msra.mxu0 0
    %1285 = vmatprep.subr.bf16.mxu0 0
    %1286 = vmatpush2.bf16.msra.mxu0 0
    %1287 = vmatprep.subr.bf16.mxu0 0
    %1288 = vmatpush2.bf16.msra.mxu0 0
    %1289 = vmatprep.subr.bf16.mxu0 0
    %1290 = vmatpush2.bf16.msra.mxu0 0
    %1291 = vmatprep.mubr.bf16.mxu0 0
    %1292 = vmatmul.mubr.bf16.gmra.mxu0 %v1254
    %v1293 = vpop.f32.mrf.mxu0
    %v1294 = vadd.f32 0.0, %v1293
    %v1295 = vpop.f32.mrf.mxu0
    %v1296 = vpop.f32.mrf.mxu0
    %v1297 = vpop.f32.mrf.mxu0
    %1298 = vdwg.mxu0
    %1299 = vst [vmem:[#allocation2 + $0x28] sm:$0xff] %v1294
    %v1300 = vpack.c.bf16 %v658, %v658
    %v1301 = vpack.c.bf16 %v307, %v307
    %v1302 = vpack.c.bf16 %v393, %v393
    %1303 = vmatprep.subr.bf16.mxu0 0
    %1304 = vmatpush1.bf16.xpose.msra.mxu0 0
    %1305 = vmatprep.subr.bf16.mxu0 0
    %1306 = vmatpush1.bf16.xpose.msra.mxu0 0
    %1307 = vmatprep.subr.bf16.mxu0 0
    %1308 = vmatpush1.bf16.xpose.msra.mxu0 0
    %1309 = vmatprep.subr.bf16.mxu0 0
    %1310 = vmatpush1.bf16.xpose.msra.mxu0 0
    %1311 = vmatprep.subr.bf16.mxu0 0
    %1312 = vmatpush1.bf16.xpose.msra.mxu0 0
    %1313 = vmatprep.subr.bf16.mxu0 0
    %1314 = vmatpush1.bf16.xpose.msra.mxu0 0
    %1315 = vmatprep.subr.bf16.mxu0 0
    %1316 = vmatpush1.bf16.xpose.msra.mxu0 0
    %1317 = vmatprep.subr.bf16.mxu0 0
    %1318 = vmatpush1.bf16.xpose.msra.mxu0 %v1301
    %1319 = vmatprep.subr.bf16.mxu0 0
    %1320 = vmatpush2.bf16.xpose.msra.mxu0 0
    %1321 = vmatprep.subr.bf16.mxu0 0
    %1322 = vmatpush2.bf16.xpose.msra.mxu0 0
    %1323 = vmatprep.subr.bf16.mxu0 0
    %1324 = vmatpush2.bf16.xpose.msra.mxu0 0
    %1325 = vmatprep.subr.bf16.mxu0 0
    %1326 = vmatpush2.bf16.xpose.msra.mxu0 0
    %1327 = vmatprep.subr.bf16.mxu0 0
    %1328 = vmatpush2.bf16.xpose.msra.mxu0 0
    %1329 = vmatprep.subr.bf16.mxu0 0
    %1330 = vmatpush2.bf16.xpose.msra.mxu0 0
    %1331 = vmatprep.subr.bf16.mxu0 0
    %1332 = vmatpush2.bf16.xpose.msra.mxu0 0
    %1333 = vmatprep.subr.bf16.mxu0 0
    %1334 = vmatpush2.bf16.xpose.msra.mxu0 0
    %1335 = vmatprep.mubr.bf16.mxu0 0
    %1336 = vmatmul.mubr.bf16.gmra.mxu0 %v1300
    %v1337 = vpop.f32.mrf.mxu0
    %v1338 = vadd.f32 0.0, %v1337
    %v1339 = vpop.f32.mrf.mxu0
    %v1340 = vpop.f32.mrf.mxu0
    %v1341 = vpop.f32.mrf.mxu0
    %1342 = vdwg.mxu0
    %v1343 = vsel %vm1093, -4.2949673e+09, %v1338
    %v1344 = vsel %vm717, %v1343, -inf
    %1345 = vmax.xlane.f32.xlu0 %v1344
    %v1346 = vpop.xlane.xlu0 %1345
    %v1347 = vsub.f32 %v1343, %v1346
    %v1348 = vmul.f32 %v1347, 1.442695
    %v1349 = vpow.pop %v1348
    %v1350 = vsel %vm717, %v1349, 0.0
    %1351 = vadd.xlane.f32.xlu0 %v1350
    %v1352 = vpop.xlane.xlu0 %1351
    %v1353 = vrcp.pop %v1352
    %v1354 = vmul.f32 %v1349, %v1353
    %v1355 = vpack.c.bf16 %v1354, %v1354
    %v1357 = vsel %vm717, %v1355, 0
    %v1360 = vsel %vm733, %v1302, 0
    %1362 = vmatprep.subr.bf16.mxu0 0
    %1363 = vmatpush1.bf16.msra.mxu0 0
    %1364 = vmatprep.subr.bf16.mxu0 0
    %1365 = vmatpush1.bf16.msra.mxu0 0
    %1366 = vmatprep.subr.bf16.mxu0 0
    %1367 = vmatpush1.bf16.msra.mxu0 0
    %1368 = vmatprep.subr.bf16.mxu0 0
    %1369 = vmatpush1.bf16.msra.mxu0 0
    %1370 = vmatprep.subr.bf16.mxu0 0
    %1371 = vmatpush1.bf16.msra.mxu0 0
    %1372 = vmatprep.subr.bf16.mxu0 0
    %1373 = vmatpush1.bf16.msra.mxu0 0
    %1374 = vmatprep.subr.bf16.mxu0 0
    %1375 = vmatpush1.bf16.msra.mxu0 0
    %1376 = vmatprep.subr.bf16.mxu0 0
    %1377 = vmatpush1.bf16.msra.mxu0 %v1360
    %1378 = vmatprep.subr.bf16.mxu0 0
    %1379 = vmatpush2.bf16.msra.mxu0 0
    %1380 = vmatprep.subr.bf16.mxu0 0
    %1381 = vmatpush2.bf16.msra.mxu0 0
    %1382 = vmatprep.subr.bf16.mxu0 0
    %1383 = vmatpush2.bf16.msra.mxu0 0
    %1384 = vmatprep.subr.bf16.mxu0 0
    %1385 = vmatpush2.bf16.msra.mxu0 0
    %1386 = vmatprep.subr.bf16.mxu0 0
    %1387 = vmatpush2.bf16.msra.mxu0 0
    %1388 = vmatprep.subr.bf16.mxu0 0
    %1389 = vmatpush2.bf16.msra.mxu0 0
    %1390 = vmatprep.subr.bf16.mxu0 0
    %1391 = vmatpush2.bf16.msra.mxu0 0
    %1392 = vmatprep.subr.bf16.mxu0 0
    %1393 = vmatpush2.bf16.msra.mxu0 0
    %1394 = vmatprep.mubr.bf16.mxu0 0
    %1395 = vmatmul.mubr.bf16.gmra.mxu0 %v1357
    %v1396 = vpop.f32.mrf.mxu0
    %v1397 = vadd.f32 0.0, %v1396
    %v1398 = vpop.f32.mrf.mxu0
    %v1399 = vpop.f32.mrf.mxu0
    %v1400 = vpop.f32.mrf.mxu0
    %1401 = vdwg.mxu0
    %1402 = vst [vmem:[#allocation2 + $0x30] sm:$0xff] %v1397
    %v1403 = vpack.c.bf16 %v660, %v660
    %v1404 = vpack.c.bf16 %v348, %v348
    %v1405 = vpack.c.bf16 %v433, %v433
    %1406 = vmatprep.subr.bf16.mxu0 0
    %1407 = vmatpush1.bf16.xpose.msra.mxu0 0
    %1408 = vmatprep.subr.bf16.mxu0 0
    %1409 = vmatpush1.bf16.xpose.msra.mxu0 0
    %1410 = vmatprep.subr.bf16.mxu0 0
    %1411 = vmatpush1.bf16.xpose.msra.mxu0 0
    %1412 = vmatprep.subr.bf16.mxu0 0
    %1413 = vmatpush1.bf16.xpose.msra.mxu0 0
    %1414 = vmatprep.subr.bf16.mxu0 0
    %1415 = vmatpush1.bf16.xpose.msra.mxu0 0
    %1416 = vmatprep.subr.bf16.mxu0 0
    %1417 = vmatpush1.bf16.xpose.msra.mxu0 0
    %1418 = vmatprep.subr.bf16.mxu0 0
    %1419 = vmatpush1.bf16.xpose.msra.mxu0 0
    %1420 = vmatprep.subr.bf16.mxu0 0
    %1421 = vmatpush1.bf16.xpose.msra.mxu0 %v1404
    %1422 = vmatprep.subr.bf16.mxu0 0
    %1423 = vmatpush2.bf16.xpose.msra.mxu0 0
    %1424 = vmatprep.subr.bf16.mxu0 0
    %1425 = vmatpush2.bf16.xpose.msra.mxu0 0
    %1426 = vmatprep.subr.bf16.mxu0 0
    %1427 = vmatpush2.bf16.xpose.msra.mxu0 0
    %1428 = vmatprep.subr.bf16.mxu0 0
    %1429 = vmatpush2.bf16.xpose.msra.mxu0 0
    %1430 = vmatprep.subr.bf16.mxu0 0
    %1431 = vmatpush2.bf16.xpose.msra.mxu0 0
    %1432 = vmatprep.subr.bf16.mxu0 0
    %1433 = vmatpush2.bf16.xpose.msra.mxu0 0
    %1434 = vmatprep.subr.bf16.mxu0 0
    %1435 = vmatpush2.bf16.xpose.msra.mxu0 0
    %1436 = vmatprep.subr.bf16.mxu0 0
    %1437 = vmatpush2.bf16.xpose.msra.mxu0 0
    %1438 = vmatprep.mubr.bf16.mxu0 0
    %1439 = vmatmul.mubr.bf16.gmra.mxu0 %v1403
    %v1440 = vpop.f32.mrf.mxu0
    %v1441 = vadd.f32 0.0, %v1440
    %v1442 = vpop.f32.mrf.mxu0
    %v1443 = vpop.f32.mrf.mxu0
    %v1444 = vpop.f32.mrf.mxu0
    %1445 = vdwg.mxu0
    %v1446 = vsel %vm1093, -4.2949673e+09, %v1441
    %v1447 = vsel %vm717, %v1446, -inf
    %1448 = vmax.xlane.f32.xlu0 %v1447
    %v1449 = vpop.xlane.xlu0 %1448
    %v1450 = vsub.f32 %v1446, %v1449
    %v1451 = vmul.f32 %v1450, 1.442695
    %v1452 = vpow.pop %v1451
    %v1453 = vsel %vm717, %v1452, 0.0
    %1454 = vadd.xlane.f32.xlu0 %v1453
    %v1455 = vpop.xlane.xlu0 %1454
    %v1456 = vrcp.pop %v1455
    %v1457 = vmul.f32 %v1452, %v1456
    %v1458 = vpack.c.bf16 %v1457, %v1457
    %v1460 = vsel %vm717, %v1458, 0
    %v1463 = vsel %vm733, %v1405, 0
    %1465 = vmatprep.subr.bf16.mxu0 0
    %1466 = vmatpush1.bf16.msra.mxu0 0
    %1467 = vmatprep.subr.bf16.mxu0 0
    %1468 = vmatpush1.bf16.msra.mxu0 0
    %1469 = vmatprep.subr.bf16.mxu0 0
    %1470 = vmatpush1.bf16.msra.mxu0 0
    %1471 = vmatprep.subr.bf16.mxu0 0
    %1472 = vmatpush1.bf16.msra.mxu0 0
    %1473 = vmatprep.subr.bf16.mxu0 0
    %1474 = vmatpush1.bf16.msra.mxu0 0
    %1475 = vmatprep.subr.bf16.mxu0 0
    %1476 = vmatpush1.bf16.msra.mxu0 0
    %1477 = vmatprep.subr.bf16.mxu0 0
    %1478 = vmatpush1.bf16.msra.mxu0 0
    %1479 = vmatprep.subr.bf16.mxu0 0
    %1480 = vmatpush1.bf16.msra.mxu0 %v1463
    %1481 = vmatprep.subr.bf16.mxu0 0
    %1482 = vmatpush2.bf16.msra.mxu0 0
    %1483 = vmatprep.subr.bf16.mxu0 0
    %1484 = vmatpush2.bf16.msra.mxu0 0
    %1485 = vmatprep.subr.bf16.mxu0 0
    %1486 = vmatpush2.bf16.msra.mxu0 0
    %1487 = vmatprep.subr.bf16.mxu0 0
    %1488 = vmatpush2.bf16.msra.mxu0 0
    %1489 = vmatprep.subr.bf16.mxu0 0
    %1490 = vmatpush2.bf16.msra.mxu0 0
    %1491 = vmatprep.subr.bf16.mxu0 0
    %1492 = vmatpush2.bf16.msra.mxu0 0
    %1493 = vmatprep.subr.bf16.mxu0 0
    %1494 = vmatpush2.bf16.msra.mxu0 0
    %1495 = vmatprep.subr.bf16.mxu0 0
    %1496 = vmatpush2.bf16.msra.mxu0 0
    %1497 = vmatprep.mubr.bf16.mxu0 0
    %1498 = vmatmul.mubr.bf16.gmra.mxu0 %v1460
    %v1499 = vpop.f32.mrf.mxu0
    %v1500 = vadd.f32 0.0, %v1499
    %v1501 = vpop.f32.mrf.mxu0
    %v1502 = vpop.f32.mrf.mxu0
    %v1503 = vpop.f32.mrf.mxu0
    %1504 = vdwg.mxu0
    %1505 = vst [vmem:[#allocation2 + $0x38] sm:$0xff] %v1500
    %v1506 = vld [vmem:[#allocation2] sm:$0xff]
    %v1507 = vld [vmem:[#allocation2 + $0x8] sm:$0xff]
    %v1508 = vld [vmem:[#allocation2 + $0x10] sm:$0xff]
    %v1509 = vld [vmem:[#allocation2 + $0x18] sm:$0xff]
    %v1510 = vld [vmem:[#allocation2 + $0x20] sm:$0xff]
    %v1511 = vld [vmem:[#allocation2 + $0x28] sm:$0xff]
    %v1512 = vld [vmem:[#allocation2 + $0x30] sm:$0xff]
    %v1513 = vld [vmem:[#allocation2 + $0x38] sm:$0xff]
    %v1514 = vpack.c.bf16 %v1510, %v1506
    %v1515 = vpack.c.bf16 %v1511, %v1507
    %v1516 = vpack.c.bf16 %v1512, %v1508
    %v1517 = vpack.c.bf16 %v1513, %v1509
    %v1518 = vld [vmem:[%s8] sm:$0xf]
    %v1519 = vld [vmem:[%s8 + $0x4] sm:$0xf]
    %v1520 = vld [vmem:[%s8 + $0x8] sm:$0xf]
    %v1521 = vld [vmem:[%s8 + $0xc] sm:$0xf]
    %v1522 = vld [vmem:[%s8 + $0x10] sm:$0xf]
    %v1523 = vld [vmem:[%s8 + $0x14] sm:$0xf]
    %v1524 = vld [vmem:[%s8 + $0x18] sm:$0xf]
    %v1525 = vld [vmem:[%s8 + $0x1c] sm:$0xf]
    %v1526 = vld [vmem:[%s8 + $0x20] sm:$0xf]
    %v1527 = vld [vmem:[%s8 + $0x24] sm:$0xf]
    %v1528 = vld [vmem:[%s8 + $0x28] sm:$0xf]
    %v1529 = vld [vmem:[%s8 + $0x2c] sm:$0xf]
    %v1530 = vld [vmem:[%s8 + $0x30] sm:$0xf]
    %v1531 = vld [vmem:[%s8 + $0x34] sm:$0xf]
    %v1532 = vld [vmem:[%s8 + $0x38] sm:$0xf]
    %v1533 = vld [vmem:[%s8 + $0x3c] sm:$0xf]
    %v1534 = vld [vmem:[%s8 + $0x40] sm:$0xf]
    %v1535 = vld [vmem:[%s8 + $0x44] sm:$0xf]
    %v1536 = vld [vmem:[%s8 + $0x48] sm:$0xf]
    %v1537 = vld [vmem:[%s8 + $0x4c] sm:$0xf]
    %v1538 = vld [vmem:[%s8 + $0x50] sm:$0xf]
    %v1539 = vld [vmem:[%s8 + $0x54] sm:$0xf]
    %v1540 = vld [vmem:[%s8 + $0x58] sm:$0xf]
    %v1541 = vld [vmem:[%s8 + $0x5c] sm:$0xf]
    %v1542 = vld [vmem:[%s8 + $0x60] sm:$0xf]
    %v1543 = vld [vmem:[%s8 + $0x64] sm:$0xf]
    %v1544 = vld [vmem:[%s8 + $0x68] sm:$0xf]
    %v1545 = vld [vmem:[%s8 + $0x6c] sm:$0xf]
    %v1546 = vld [vmem:[%s8 + $0x70] sm:$0xf]
    %v1547 = vld [vmem:[%s8 + $0x74] sm:$0xf]
    %v1548 = vld [vmem:[%s8 + $0x78] sm:$0xf]
    %v1549 = vld [vmem:[%s8 + $0x7c] sm:$0xf]
    %v1550 = vld [vmem:[%s8 + $0x80] sm:$0xf]
    %v1551 = vld [vmem:[%s8 + $0x84] sm:$0xf]
    %v1552 = vld [vmem:[%s8 + $0x88] sm:$0xf]
    %v1553 = vld [vmem:[%s8 + $0x8c] sm:$0xf]
    %v1554 = vld [vmem:[%s8 + $0x90] sm:$0xf]
    %v1555 = vld [vmem:[%s8 + $0x94] sm:$0xf]
    %v1556 = vld [vmem:[%s8 + $0x98] sm:$0xf]
    %v1557 = vld [vmem:[%s8 + $0x9c] sm:$0xf]
    %v1558 = vld [vmem:[%s8 + $0xa0] sm:$0xf]
    %v1559 = vld [vmem:[%s8 + $0xa4] sm:$0xf]
    %v1560 = vld [vmem:[%s8 + $0xa8] sm:$0xf]
    %v1561 = vld [vmem:[%s8 + $0xac] sm:$0xf]
    %v1562 = vld [vmem:[%s8 + $0xb0] sm:$0xf]
    %v1563 = vld [vmem:[%s8 + $0xb4] sm:$0xf]
    %v1564 = vld [vmem:[%s8 + $0xb8] sm:$0xf]
    %v1565 = vld [vmem:[%s8 + $0xbc] sm:$0xf]
    %v1566 = vld [vmem:[%s8 + $0xc0] sm:$0xf]
    %v1567 = vld [vmem:[%s8 + $0xc4] sm:$0xf]
    %v1568 = vld [vmem:[%s8 + $0xc8] sm:$0xf]
    %v1569 = vld [vmem:[%s8 + $0xcc] sm:$0xf]
    %v1570 = vld [vmem:[%s8 + $0xd0] sm:$0xf]
    %v1571 = vld [vmem:[%s8 + $0xd4] sm:$0xf]
    %v1572 = vld [vmem:[%s8 + $0xd8] sm:$0xf]
    %v1573 = vld [vmem:[%s8 + $0xdc] sm:$0xf]
    %v1574 = vld [vmem:[%s8 + $0xe0] sm:$0xf]
    %v1575 = vld [vmem:[%s8 + $0xe4] sm:$0xf]
    %v1576 = vld [vmem:[%s8 + $0xe8] sm:$0xf]
    %v1577 = vld [vmem:[%s8 + $0xec] sm:$0xf]
    %v1578 = vld [vmem:[%s8 + $0xf0] sm:$0xf]
    %v1579 = vld [vmem:[%s8 + $0xf4] sm:$0xf]
    %v1580 = vld [vmem:[%s8 + $0xf8] sm:$0xf]
    %v1581 = vld [vmem:[%s8 + $0xfc] sm:$0xf]
    %v1646 = vunpack.c.l.b16 %v1518
    %v1647 = vunpack.c.l.b16 %v1519
    %v1648 = vunpack.c.l.b16 %v1520
    %v1649 = vunpack.c.l.b16 %v1521
    %v1650 = vunpack.c.l.b16 %v1522
    %v1651 = vunpack.c.l.b16 %v1523
    %v1652 = vunpack.c.l.b16 %v1524
    %v1653 = vunpack.c.l.b16 %v1525
    %v1654 = vunpack.c.l.b16 %v1526
    %v1655 = vunpack.c.l.b16 %v1527
    %v1656 = vunpack.c.l.b16 %v1528
    %v1657 = vunpack.c.l.b16 %v1529
    %v1658 = vunpack.c.l.b16 %v1530
    %v1659 = vunpack.c.l.b16 %v1531
    %v1660 = vunpack.c.l.b16 %v1532
    %v1661 = vunpack.c.l.b16 %v1533
    %v1662 = vunpack.c.l.b16 %v1534
    %v1663 = vunpack.c.l.b16 %v1535
    %v1664 = vunpack.c.l.b16 %v1536
    %v1665 = vunpack.c.l.b16 %v1537
    %v1666 = vunpack.c.l.b16 %v1538
    %v1667 = vunpack.c.l.b16 %v1539
    %v1668 = vunpack.c.l.b16 %v1540
    %v1669 = vunpack.c.l.b16 %v1541
    %v1670 = vunpack.c.l.b16 %v1542
    %v1671 = vunpack.c.l.b16 %v1543
    %v1672 = vunpack.c.l.b16 %v1544
    %v1673 = vunpack.c.l.b16 %v1545
    %v1674 = vunpack.c.l.b16 %v1546
    %v1675 = vunpack.c.l.b16 %v1547
    %v1676 = vunpack.c.l.b16 %v1548
    %v1677 = vunpack.c.l.b16 %v1549
    %v1678 = vunpack.c.l.b16 %v1550
    %v1679 = vunpack.c.l.b16 %v1551
    %v1680 = vunpack.c.l.b16 %v1552
    %v1681 = vunpack.c.l.b16 %v1553
    %v1682 = vunpack.c.l.b16 %v1554
    %v1683 = vunpack.c.l.b16 %v1555
    %v1684 = vunpack.c.l.b16 %v1556
    %v1685 = vunpack.c.l.b16 %v1557
    %v1686 = vunpack.c.l.b16 %v1558
    %v1687 = vunpack.c.l.b16 %v1559
    %v1688 = vunpack.c.l.b16 %v1560
    %v1689 = vunpack.c.l.b16 %v1561
    %v1690 = vunpack.c.l.b16 %v1562
    %v1691 = vunpack.c.l.b16 %v1563
    %v1692 = vunpack.c.l.b16 %v1564
    %v1693 = vunpack.c.l.b16 %v1565
    %v1694 = vunpack.c.l.b16 %v1566
    %v1695 = vunpack.c.l.b16 %v1567
    %v1696 = vunpack.c.l.b16 %v1568
    %v1697 = vunpack.c.l.b16 %v1569
    %v1698 = vunpack.c.l.b16 %v1570
    %v1699 = vunpack.c.l.b16 %v1571
    %v1700 = vunpack.c.l.b16 %v1572
    %v1701 = vunpack.c.l.b16 %v1573
    %v1702 = vunpack.c.l.b16 %v1574
    %v1703 = vunpack.c.l.b16 %v1575
    %v1704 = vunpack.c.l.b16 %v1576
    %v1705 = vunpack.c.l.b16 %v1577
    %v1706 = vunpack.c.l.b16 %v1578
    %v1707 = vunpack.c.l.b16 %v1579
    %v1708 = vunpack.c.l.b16 %v1580
    %v1709 = vunpack.c.l.b16 %v1581
    %v1710 = vpack.c.b16 %v1647, %v1646
    %v1711 = vpack.c.b16 %v1649, %v1648
    %v1712 = vpack.c.b16 %v1651, %v1650
    %v1713 = vpack.c.b16 %v1653, %v1652
    %v1714 = vpack.c.b16 %v1655, %v1654
    %v1715 = vpack.c.b16 %v1657, %v1656
    %v1716 = vpack.c.b16 %v1659, %v1658
    %v1717 = vpack.c.b16 %v1661, %v1660
    %v1718 = vpack.c.b16 %v1663, %v1662
    %v1719 = vpack.c.b16 %v1665, %v1664
    %v1720 = vpack.c.b16 %v1667, %v1666
    %v1721 = vpack.c.b16 %v1669, %v1668
    %v1722 = vpack.c.b16 %v1671, %v1670
    %v1723 = vpack.c.b16 %v1673, %v1672
    %v1724 = vpack.c.b16 %v1675, %v1674
    %v1725 = vpack.c.b16 %v1677, %v1676
    %v1726 = vpack.c.b16 %v1679, %v1678
    %v1727 = vpack.c.b16 %v1681, %v1680
    %v1728 = vpack.c.b16 %v1683, %v1682
    %v1729 = vpack.c.b16 %v1685, %v1684
    %v1730 = vpack.c.b16 %v1687, %v1686
    %v1731 = vpack.c.b16 %v1689, %v1688
    %v1732 = vpack.c.b16 %v1691, %v1690
    %v1733 = vpack.c.b16 %v1693, %v1692
    %v1734 = vpack.c.b16 %v1695, %v1694
    %v1735 = vpack.c.b16 %v1697, %v1696
    %v1736 = vpack.c.b16 %v1699, %v1698
    %v1737 = vpack.c.b16 %v1701, %v1700
    %v1738 = vpack.c.b16 %v1703, %v1702
    %v1739 = vpack.c.b16 %v1705, %v1704
    %v1740 = vpack.c.b16 %v1707, %v1706
    %v1741 = vpack.c.b16 %v1709, %v1708
    %1774 = vmatprep.subr.bf16.mxu0 0
    %1775 = vmatpush1.bf16.msra.mxu0 %v1717
    %1776 = vmatprep.subr.bf16.mxu0 0
    %1777 = vmatpush1.bf16.msra.mxu0 %v1716
    %1778 = vmatprep.subr.bf16.mxu0 0
    %1779 = vmatpush1.bf16.msra.mxu0 %v1715
    %1780 = vmatprep.subr.bf16.mxu0 0
    %1781 = vmatpush1.bf16.msra.mxu0 %v1714
    %1782 = vmatprep.subr.bf16.mxu0 0
    %1783 = vmatpush1.bf16.msra.mxu0 %v1713
    %1784 = vmatprep.subr.bf16.mxu0 0
    %1785 = vmatpush1.bf16.msra.mxu0 %v1712
    %1786 = vmatprep.subr.bf16.mxu0 0
    %1787 = vmatpush1.bf16.msra.mxu0 %v1711
    %1788 = vmatprep.subr.bf16.mxu0 0
    %1789 = vmatpush1.bf16.msra.mxu0 %v1710
    %1790 = vmatprep.subr.bf16.mxu0 0
    %1791 = vmatpush2.bf16.msra.mxu0 %v1725
    %1792 = vmatprep.subr.bf16.mxu0 0
    %1793 = vmatpush2.bf16.msra.mxu0 %v1724
    %1794 = vmatprep.subr.bf16.mxu0 0
    %1795 = vmatpush2.bf16.msra.mxu0 %v1723
    %1796 = vmatprep.subr.bf16.mxu0 0
    %1797 = vmatpush2.bf16.msra.mxu0 %v1722
    %1798 = vmatprep.subr.bf16.mxu0 0
    %1799 = vmatpush2.bf16.msra.mxu0 %v1721
    %1800 = vmatprep.subr.bf16.mxu0 0
    %1801 = vmatpush2.bf16.msra.mxu0 %v1720
    %1802 = vmatprep.subr.bf16.mxu0 0
    %1803 = vmatpush2.bf16.msra.mxu0 %v1719
    %1804 = vmatprep.subr.bf16.mxu0 0
    %1805 = vmatpush2.bf16.msra.mxu0 %v1718
    %1806 = vmatprep.mubr.bf16.mxu0 %v1515
    %1807 = vmatmul.mubr.bf16.gmra.mxu0 %v1514
    %v1808 = vpop.f32.mrf.mxu0
    %v1809 = vadd.f32 0.0, %v1808
    %v1810 = vpop.f32.mrf.mxu0
    %v1811 = vpop.f32.mrf.mxu0
    %v1812 = vadd.f32 0.0, %v1811
    %v1813 = vpop.f32.mrf.mxu0
    %1814 = vdwg.mxu0
    %1815 = vmatprep.subr.bf16.mxu0 0
    %1816 = vmatpush1.bf16.msra.mxu0 %v1733
    %1817 = vmatprep.subr.bf16.mxu0 0
    %1818 = vmatpush1.bf16.msra.mxu0 %v1732
    %1819 = vmatprep.subr.bf16.mxu0 0
    %1820 = vmatpush1.bf16.msra.mxu0 %v1731
    %1821 = vmatprep.subr.bf16.mxu0 0
    %1822 = vmatpush1.bf16.msra.mxu0 %v1730
    %1823 = vmatprep.subr.bf16.mxu0 0
    %1824 = vmatpush1.bf16.msra.mxu0 %v1729
    %1825 = vmatprep.subr.bf16.mxu0 0
    %1826 = vmatpush1.bf16.msra.mxu0 %v1728
    %1827 = vmatprep.subr.bf16.mxu0 0
    %1828 = vmatpush1.bf16.msra.mxu0 %v1727
    %1829 = vmatprep.subr.bf16.mxu0 0
    %1830 = vmatpush1.bf16.msra.mxu0 %v1726
    %1831 = vmatprep.subr.bf16.mxu0 0
    %1832 = vmatpush2.bf16.msra.mxu0 %v1741
    %1833 = vmatprep.subr.bf16.mxu0 0
    %1834 = vmatpush2.bf16.msra.mxu0 %v1740
    %1835 = vmatprep.subr.bf16.mxu0 0
    %1836 = vmatpush2.bf16.msra.mxu0 %v1739
    %1837 = vmatprep.subr.bf16.mxu0 0
    %1838 = vmatpush2.bf16.msra.mxu0 %v1738
    %1839 = vmatprep.subr.bf16.mxu0 0
    %1840 = vmatpush2.bf16.msra.mxu0 %v1737
    %1841 = vmatprep.subr.bf16.mxu0 0
    %1842 = vmatpush2.bf16.msra.mxu0 %v1736
    %1843 = vmatprep.subr.bf16.mxu0 0
    %1844 = vmatpush2.bf16.msra.mxu0 %v1735
    %1845 = vmatprep.subr.bf16.mxu0 0
    %1846 = vmatpush2.bf16.msra.mxu0 %v1734
    %1847 = vmatprep.mubr.bf16.mxu0 %v1517
    %1848 = vmatmul.mubr.bf16.gmra.mxu0 %v1516
    %v1849 = vpop.f32.mrf.mxu0
    %v1850 = vadd.f32 %v1809, %v1849
    %v1851 = vpop.f32.mrf.mxu0
    %v1852 = vpop.f32.mrf.mxu0
    %v1853 = vadd.f32 %v1812, %v1852
    %v1854 = vpop.f32.mrf.mxu0
    %1855 = vdwg.mxu0
    %v1856 = vld [vmem:[%s13] sm:$0x1]
    %v1857 = vld [vmem:[%s14] sm:$0x1]
    %v1858 = vadd.f32 %v522, %v1850
    %v1859 = vadd.f32 %v523, %v1853
    %v1860 = vsel %vm219, %v1858, 0.0
    %1861 = vadd.xlane.f32.xlu0 %v1860
    %v1862 = vpop.xlane.xlu0 %1861
    %v1863 = vsel %vm219, %v1859, 0.0
    %1864 = vadd.xlane.f32.xlu0 %v1863
    %v1865 = vpop.xlane.xlu0 %1864
    %v1866 = vrcp.pop 32.0
    %v1867 = vmul.f32 %v1862, %v1866
    %v1868 = vmul.f32 %v1865, %v1866
    %v1869 = vsub.f32 %v1858, %v1867
    %v1870 = vsub.f32 %v1859, %v1868
    %v1871 = vmul.f32 %v1869, %v1869
    %v1872 = vmul.f32 %v1870, %v1870
    %v1873 = vsel %vm219, %v1871, 0.0
    %1874 = vadd.xlane.f32.xlu0 %v1873
    %v1875 = vpop.xlane.xlu0 %1874
    %v1876 = vsel %vm219, %v1872, 0.0
    %1877 = vadd.xlane.f32.xlu0 %v1876
    %v1878 = vpop.xlane.xlu0 %1877
    %v1879 = vmul.f32 %v1875, %v1866
    %v1880 = vmul.f32 %v1878, %v1866
    %v1881 = vadd.f32 %v1879, 1e-05
    %v1882 = vadd.f32 %v1880, 1e-05
    %v1883 = vrsqrt.pop %v1881
    %v1884 = vrsqrt.pop %v1882
    %v1885 = vmul.f32 %v1869, %v1883
    %v1886 = vmul.f32 %v1870, %v1884
    %v1888 = vlaneseq
    %v1889 = vshrl.u32 %v1888, 7
    %v1890 = vsub.s32 0, %v1889
    %v1891 = vrot.slane %v1856, %v1890
    %v1893 = vmul.f32 %v1885, %v1891
    %v1894 = vmul.f32 %v1886, %v1891
    %v1896 = vlaneseq
    %v1897 = vshrl.u32 %v1896, 7
    %v1898 = vsub.s32 0, %v1897
    %v1899 = vrot.slane %v1857, %v1898
    %v1901 = vadd.f32 %v1893, %v1899
    %v1902 = vadd.f32 %v1894, %v1899
    %v1903 = vpack.c.bf16 %v1902, %v1901
    %v1904 = vld [vmem:[%s9] sm:$0xf]
    %v1905 = vld [vmem:[%s9 + $0x4] sm:$0xf]
    %v1906 = vld [vmem:[%s9 + $0x8] sm:$0xf]
    %v1907 = vld [vmem:[%s9 + $0xc] sm:$0xf]
    %v1908 = vld [vmem:[%s10] sm:$0x1]
    %v1910 = vlaneseq
    %v1911 = vshrl.u32 %v1910, 7
    %v1912 = vsub.s32 0, %v1911
    %v1913 = vrot.slane %v1908, %v1912
    %v1919 = vunpack.c.l.b16 %v1904
    %v1920 = vunpack.c.l.b16 %v1905
    %v1921 = vunpack.c.l.b16 %v1906
    %v1922 = vunpack.c.l.b16 %v1907
    %v1923 = vpack.c.b16 %v1920, %v1919
    %v1924 = vpack.c.b16 %v1922, %v1921
    %v1928 = vsel %vm219, %v1903, 0
    %1930 = vmatprep.subr.bf16.mxu0 0
    %1931 = vmatpush1.bf16.msra.mxu0 0
    %1932 = vmatprep.subr.bf16.mxu0 0
    %1933 = vmatpush1.bf16.msra.mxu0 0
    %1934 = vmatprep.subr.bf16.mxu0 0
    %1935 = vmatpush1.bf16.msra.mxu0 0
    %1936 = vmatprep.subr.bf16.mxu0 0
    %1937 = vmatpush1.bf16.msra.mxu0 0
    %1938 = vmatprep.subr.bf16.mxu0 0
    %1939 = vmatpush1.bf16.msra.mxu0 0
    %1940 = vmatprep.subr.bf16.mxu0 0
    %1941 = vmatpush1.bf16.msra.mxu0 0
    %1942 = vmatprep.subr.bf16.mxu0 0
    %1943 = vmatpush1.bf16.msra.mxu0 %v1924
    %1944 = vmatprep.subr.bf16.mxu0 0
    %1945 = vmatpush1.bf16.msra.mxu0 %v1923
    %1946 = vmatprep.subr.bf16.mxu0 0
    %1947 = vmatpush2.bf16.msra.mxu0 0
    %1948 = vmatprep.subr.bf16.mxu0 0
    %1949 = vmatpush2.bf16.msra.mxu0 0
    %1950 = vmatprep.subr.bf16.mxu0 0
    %1951 = vmatpush2.bf16.msra.mxu0 0
    %1952 = vmatprep.subr.bf16.mxu0 0
    %1953 = vmatpush2.bf16.msra.mxu0 0
    %1954 = vmatprep.subr.bf16.mxu0 0
    %1955 = vmatpush2.bf16.msra.mxu0 0
    %1956 = vmatprep.subr.bf16.mxu0 0
    %1957 = vmatpush2.bf16.msra.mxu0 0
    %1958 = vmatprep.subr.bf16.mxu0 0
    %1959 = vmatpush2.bf16.msra.mxu0 0
    %1960 = vmatprep.subr.bf16.mxu0 0
    %1961 = vmatpush2.bf16.msra.mxu0 0
    %1962 = vmatprep.mubr.bf16.mxu0 0
    %1963 = vmatmul.mubr.bf16.gmra.mxu0 %v1928
    %v1964 = vpop.f32.mrf.mxu0
    %v1965 = vadd.f32 %v1913, %v1964
    %v1966 = vpop.f32.mrf.mxu0
    %v1967 = vpop.f32.mrf.mxu0
    %v1968 = vadd.f32 %v1913, %v1967
    %v1969 = vpop.f32.mrf.mxu0
    %1970 = vdwg.mxu0
    %v1971 = vmax.f32 %v1965, 0.0
    %v1972 = vmax.f32 %v1968, 0.0
    %v1973 = vpack.c.bf16 %v1972, %v1971
    %v1974 = vld [vmem:[%s11] sm:$0xf]
    %v1975 = vld [vmem:[%s11 + $0x4] sm:$0xf]
    %v1976 = vld [vmem:[%s11 + $0x8] sm:$0xf]
    %v1977 = vld [vmem:[%s11 + $0xc] sm:$0xf]
    %v1978 = vld [vmem:[%s12] sm:$0x1]
    %v1980 = vlaneseq
    %v1981 = vshrl.u32 %v1980, 7
    %v1982 = vsub.s32 0, %v1981
    %v1983 = vrot.slane %v1978, %v1982
    %v1989 = vunpack.c.l.b16 %v1974
    %v1990 = vunpack.c.l.b16 %v1975
    %v1991 = vunpack.c.l.b16 %v1976
    %v1992 = vunpack.c.l.b16 %v1977
    %v1993 = vpack.c.b16 %v1990, %v1989
    %v1994 = vpack.c.b16 %v1992, %v1991
    %v1998 = vsel %vm219, %v1973, 0
    %2000 = vmatprep.subr.bf16.mxu0 0
    %2001 = vmatpush1.bf16.msra.mxu0 0
    %2002 = vmatprep.subr.bf16.mxu0 0
    %2003 = vmatpush1.bf16.msra.mxu0 0
    %2004 = vmatprep.subr.bf16.mxu0 0
    %2005 = vmatpush1.bf16.msra.mxu0 0
    %2006 = vmatprep.subr.bf16.mxu0 0
    %2007 = vmatpush1.bf16.msra.mxu0 0
    %2008 = vmatprep.subr.bf16.mxu0 0
    %2009 = vmatpush1.bf16.msra.mxu0 0
    %2010 = vmatprep.subr.bf16.mxu0 0
    %2011 = vmatpush1.bf16.msra.mxu0 0
    %2012 = vmatprep.subr.bf16.mxu0 0
    %2013 = vmatpush1.bf16.msra.mxu0 %v1994
    %2014 = vmatprep.subr.bf16.mxu0 0
    %2015 = vmatpush1.bf16.msra.mxu0 %v1993
    %2016 = vmatprep.subr.bf16.mxu0 0
    %2017 = vmatpush2.bf16.msra.mxu0 0
    %2018 = vmatprep.subr.bf16.mxu0 0
    %2019 = vmatpush2.bf16.msra.mxu0 0
    %2020 = vmatprep.subr.bf16.mxu0 0
    %2021 = vmatpush2.bf16.msra.mxu0 0
    %2022 = vmatprep.subr.bf16.mxu0 0
    %2023 = vmatpush2.bf16.msra.mxu0 0
    %2024 = vmatprep.subr.bf16.mxu0 0
    %2025 = vmatpush2.bf16.msra.mxu0 0
    %2026 = vmatprep.subr.bf16.mxu0 0
    %2027 = vmatpush2.bf16.msra.mxu0 0
    %2028 = vmatprep.subr.bf16.mxu0 0
    %2029 = vmatpush2.bf16.msra.mxu0 0
    %2030 = vmatprep.subr.bf16.mxu0 0
    %2031 = vmatpush2.bf16.msra.mxu0 0
    %2032 = vmatprep.mubr.bf16.mxu0 0
    %2033 = vmatmul.mubr.bf16.gmra.mxu0 %v1998
    %v2034 = vpop.f32.mrf.mxu0
    %v2035 = vadd.f32 %v1983, %v2034
    %v2036 = vpop.f32.mrf.mxu0
    %v2037 = vpop.f32.mrf.mxu0
    %v2038 = vadd.f32 %v1983, %v2037
    %v2039 = vpop.f32.mrf.mxu0
    %2040 = vdwg.mxu0
    %v2041 = vadd.f32 %v2035, %v1901
    %v2042 = vadd.f32 %v2038, %v1902
    %v2043 = vsel %vm219, %v2041, 0.0
    %2044 = vadd.xlane.f32.xlu0 %v2043
    %v2045 = vpop.xlane.xlu0 %2044
    %v2046 = vsel %vm219, %v2042, 0.0
    %2047 = vadd.xlane.f32.xlu0 %v2046
    %v2048 = vpop.xlane.xlu0 %2047
    %v2049 = vmul.f32 %v2045, %v1866
    %v2050 = vmul.f32 %v2048, %v1866
    %v2051 = vsub.f32 %v2041, %v2049
    %v2052 = vsub.f32 %v2042, %v2050
    %v2053 = vmul.f32 %v2051, %v2051
    %v2054 = vmul.f32 %v2052, %v2052
    %v2055 = vsel %vm219, %v2053, 0.0
    %2056 = vadd.xlane.f32.xlu0 %v2055
    %v2057 = vpop.xlane.xlu0 %2056
    %v2058 = vsel %vm219, %v2054, 0.0
    %2059 = vadd.xlane.f32.xlu0 %v2058
    %v2060 = vpop.xlane.xlu0 %2059
    %v2061 = vmul.f32 %v2057, %v1866
    %v2062 = vmul.f32 %v2060, %v1866
    %v2063 = vadd.f32 %v2061, 1e-05
    %v2064 = vadd.f32 %v2062, 1e-05
    %v2065 = vrsqrt.pop %v2063
    %v2066 = vrsqrt.pop %v2064
    %v2067 = vmul.f32 %v2051, %v2065
    %v2068 = vmul.f32 %v2052, %v2066
    %v2069 = vmul.f32 %v2067, %v1891
    %v2070 = vmul.f32 %v2068, %v1891
    %v2071 = vadd.f32 %v2069, %v1899
    %v2072 = vadd.f32 %v2070, %v1899
    %2073 = vst.msk [vmem:[#allocation3] sm:$0xff] %vm219, %v2071
    %2074 = vst.msk [vmem:[#allocation3 + $0x8] sm:$0xff] %vm219, %v2072
    // Predicated region
    $region62: #{tpu_custom_call.1} parent=1 // pred_check
      _
    $region63: #{tpu_custom_call.1} parent=1 // pred_check_branch
      %2076 = sbr.rel (0) target = $region65
    $region64: #{tpu_custom_call.1} parent=1 // pred_region
      %s2078 = ssub.s32 256, 256
      %2079 = vsyncadd [#allocation4], %s2078
      %s2080 = sshll.u32 [#allocation3], 4
      %s2081 = int_to_ptr.vmem [resolvable:$true] %s2080
      %2086 = dma.vmem_to_hbm [thread:$0]  %s2081, 256, %s15, [#allocation4], 128, 128, 8
    $region65: #{tpu_custom_call.1} parent=1 // pred_fallthru
      _
    // Predicated region
    $region66: #{tpu_custom_call.1} parent=1 // pred_check
      _
    $region67: #{tpu_custom_call.1} parent=1 // pred_check_branch
      %2088 = sbr.rel (0) target = $region69
    $region68: #{tpu_custom_call.1} parent=1 // pred_region
      %2089 = dma.done [#allocation4], 256
    $region69: #{tpu_custom_call.1} parent=1 // pred_fallthru
      _
    %2090 = vsyncpa [#allocation4], 1

</llo_original>
